<compile_context>
chip_gen: v5e
topology: v5e:2x2
jax: 0.10.0
libtpu: 0.0.40
codegen_flags: <defaults>
</compile_context>

<pallas_src>
import functools

import jax
import jax.numpy as jnp
from jax.experimental import pallas as pl
from jax.experimental.pallas import tpu as pltpu

# ---------------- small model config (ModelArgs analogue) ----------------
DIM = 64
N_LAYERS = 2
N_HEADS = 4
N_KV_HEADS = 2
HEAD_DIM = DIM // N_HEADS            # 16
N_REP = N_HEADS // N_KV_HEADS        # 2
HIDDEN_DIM = 4 * DIM                 # ffn_dim_multiplier is None -> 4 * dim
VOCAB = 128
MAX_SEQ_LEN = 16
NORM_EPS = 1e-5
BATCH = 2
Q_DIM = N_HEADS * HEAD_DIM           # 64
KV_DIM = N_KV_HEADS * HEAD_DIM       # 32
QKV_DIM = Q_DIM + 2 * KV_DIM         # 128 (fused q|k|v projection, lane-dense)


# --------------------------- fused decode kernel ---------------------------
def decode_kernel(sp_ref,                                    # scalar prefetch (SMEM)
                  h0_ref, cos_ref, sin_ref, kc_ref, vc_ref,  # activations / rope / cache
                  attn_g_ref, wqkv_ref, wo_ref, ffn_g_ref,   # per-layer weights
                  w1_ref, w3_ref, w2_ref, fnorm_ref, wout_ref,
                  logits_ref, knew_ref, vnew_ref,            # outputs
                  h_ref):                                    # VMEM scratch (residual stream)
    layer = pl.program_id(0)
    sp = sp_ref[0]                                           # decode position

    @pl.when(layer == 0)
    def _():
        h_ref[...] = h0_ref[...]

    h = h_ref[...]                                           # (B, D), VMEM-resident

    # ---- pre-attention RMSNorm + fused QKV projection (MXU) ----
    ms = jnp.mean(h * h, axis=-1, keepdims=True)
    xn = attn_g_ref[...] * (h * jax.lax.rsqrt(ms + NORM_EPS))
    qkv = jnp.dot(xn, wqkv_ref[...], preferred_element_type=jnp.float32)   # (B, 128)

    cos = cos_ref[...]                                       # (1, HEAD_DIM/2)
    sin = sin_ref[...]

    def rope(x):
        # x: (B, HEAD_DIM) in half-rotated [evens | odds] layout (folded into weights).
        x1 = x[:, :HEAD_DIM // 2]
        x2 = x[:, HEAD_DIM // 2:]
        return jnp.concatenate([x1 * cos - x2 * sin,
                                x1 * sin + x2 * cos], axis=-1)

    # ---- new K/V rows for this token (per un-replicated KV head) ----
    k_new, v_new = [], []
    for g in range(N_KV_HEADS):
        kg = rope(qkv[:, Q_DIM + g * HEAD_DIM:Q_DIM + (g + 1) * HEAD_DIM])
        vg = qkv[:, Q_DIM + KV_DIM + g * HEAD_DIM:Q_DIM + KV_DIM + (g + 1) * HEAD_DIM]
        k_new.append(kg)                                     # (B, hd)
        v_new.append(vg)
    knew_ref[...] = jnp.concatenate(k_new, axis=0)           # (KV*B, hd), kv-major
    vnew_ref[...] = jnp.concatenate(v_new, axis=0)

    # ---- GQA attention: per query head, against un-replicated K/V (MXU) ----
    kc = kc_ref[...]                                         # (KV*B, S, hd)
    vc = vc_ref[...]
    scale = HEAD_DIM ** -0.5
    pos = jax.lax.broadcasted_iota(jnp.int32, (BATCH, 1, MAX_SEQ_LEN), 2)
    valid = pos < sp        # cached slots [0, start_pos); current token added separately

    head_out = []
    for hq in range(N_HEADS):
        g = hq // N_REP
        kg = kc[g * BATCH:(g + 1) * BATCH]                   # (B, S, hd)
        vg = vc[g * BATCH:(g + 1) * BATCH]
        q_h = rope(qkv[:, hq * HEAD_DIM:(hq + 1) * HEAD_DIM])[:, None, :]   # (B,1,hd)

        s_c = jnp.einsum('bqd,bsd->bqs', q_h, kg,
                         preferred_element_type=jnp.float32) * scale        # (B,1,S)
        s_c = jnp.where(valid, s_c, -1e30)
        s_n = jnp.sum(q_h * k_new[g][:, None, :],
                      axis=-1, keepdims=True) * scale                       # (B,1,1)

        m = jnp.maximum(jnp.max(s_c, axis=-1, keepdims=True), s_n)
        e_c = jnp.exp(s_c - m)
        e_n = jnp.exp(s_n - m)
        inv = pl.reciprocal(jnp.sum(e_c, axis=-1, keepdims=True) + e_n,
                            approx=True)
        o = jnp.einsum('bqs,bsd->bqd', e_c, vg,
                       preferred_element_type=jnp.float32) * inv
        o = o + (e_n * inv) * v_new[g][:, None, :]                          # (B,1,hd)
        head_out.append(o[:, 0, :])
    attn = jnp.concatenate(head_out, axis=-1)                               # (B, D)

    # ---- attention output projection + residual ----
    h1 = h + jnp.dot(attn, wo_ref[...], preferred_element_type=jnp.float32)

    # ---- RMSNorm + SwiGLU FFN + residual ----
    ms2 = jnp.mean(h1 * h1, axis=-1, keepdims=True)
    hn = ffn_g_ref[...] * (h1 * jax.lax.rsqrt(ms2 + NORM_EPS))
    a = jnp.dot(hn, w1_ref[...], preferred_element_type=jnp.float32)
    b = jnp.dot(hn, w3_ref[...], preferred_element_type=jnp.float32)
    h2 = h1 + jnp.dot((a * jax.nn.sigmoid(a)) * b, w2_ref[...],
                      preferred_element_type=jnp.float32)
    h_ref[...] = h2                                           # carry to next layer (VMEM)

    # ---- final RMSNorm + vocab projection (last layer only, lane-dense out) ----
    @pl.when(layer == N_LAYERS - 1)
    def _():
        ms3 = jnp.mean(h2 * h2, axis=-1, keepdims=True)
        hf = fnorm_ref[...] * (h2 * jax.lax.rsqrt(ms3 + NORM_EPS))
        logits_ref[...] = jnp.dot(hf, wout_ref[...],
                                  preferred_element_type=jnp.float32)


# ------------------------------ JAX glue ---------------------------------
def precompute_freqs(head_dim, seq_len, theta=10000.0):
    tn = jnp.arange(0, head_dim, 2, dtype=jnp.float32) / head_dim
    inv = 1.0 / (theta ** tn)
    m = jnp.arange(seq_len, dtype=jnp.float32)
    freqs = jnp.outer(m, inv)                                 # (seq_len, hd/2)
    return jnp.cos(freqs), jnp.sin(freqs)


@functools.partial(jax.jit, donate_argnums=(3, 4))
def transformer_forward(params, tokens, start_pos, cache_k, cache_v,
                        freqs_cos, freqs_sin):
    # token embedding lookup (gather) -- glue
    h0 = params["embed"][tokens[:, 0]].astype(jnp.float32)    # (B, D)
    cos = freqs_cos[start_pos][None, :]                       # RoPE angles at start_pos
    sin = freqs_sin[start_pos][None, :]
    sp = jnp.reshape(start_pos, (1,)).astype(jnp.int32)

    grid_spec = pltpu.PrefetchScalarGridSpec(
        num_scalar_prefetch=1,
        grid=(N_LAYERS,),
        in_specs=[
            pl.BlockSpec((BATCH, DIM), lambda l, _: (0, 0)),                   # h0
            pl.BlockSpec((1, HEAD_DIM // 2), lambda l, _: (0, 0)),             # cos
            pl.BlockSpec((1, HEAD_DIM // 2), lambda l, _: (0, 0)),             # sin
            pl.BlockSpec((None, N_KV_HEADS * BATCH, MAX_SEQ_LEN, HEAD_DIM),
                         lambda l, _: (l, 0, 0, 0)),                           # K cache
            pl.BlockSpec((None, N_KV_HEADS * BATCH, MAX_SEQ_LEN, HEAD_DIM),
                         lambda l, _: (l, 0, 0, 0)),                           # V cache
            pl.BlockSpec((None, 1, DIM), lambda l, _: (l, 0, 0)),              # attn norm
            pl.BlockSpec((None, DIM, QKV_DIM), lambda l, _: (l, 0, 0)),        # wqkv
            pl.BlockSpec((None, DIM, DIM), lambda l, _: (l, 0, 0)),            # wo
            pl.BlockSpec((None, 1, DIM), lambda l, _: (l, 0, 0)),              # ffn norm
            pl.BlockSpec((None, DIM, HIDDEN_DIM), lambda l, _: (l, 0, 0)),     # w1
            pl.BlockSpec((None, DIM, HIDDEN_DIM), lambda l, _: (l, 0, 0)),     # w3
            pl.BlockSpec((None, HIDDEN_DIM, DIM), lambda l, _: (l, 0, 0)),     # w2
            pl.BlockSpec((1, DIM), lambda l, _: (0, 0)),                       # final norm
            pl.BlockSpec((DIM, VOCAB), lambda l, _: (0, 0)),                   # output proj
        ],
        out_specs=[
            pl.BlockSpec((BATCH, VOCAB), lambda l, _: (0, 0)),                 # logits
            pl.BlockSpec((None, N_KV_HEADS * BATCH, HEAD_DIM),
                         lambda l, _: (l, 0, 0)),                              # new K rows
            pl.BlockSpec((None, N_KV_HEADS * BATCH, HEAD_DIM),
                         lambda l, _: (l, 0, 0)),                              # new V rows
        ],
        scratch_shapes=[pltpu.VMEM((BATCH, DIM), jnp.float32)],                # h carry
    )

    logits, k_rows, v_rows = pl.pallas_call(
        decode_kernel,
        grid_spec=grid_spec,
        out_shape=(
            jax.ShapeDtypeStruct((BATCH, VOCAB), jnp.float32),
            jax.ShapeDtypeStruct((N_LAYERS, N_KV_HEADS * BATCH, HEAD_DIM), jnp.float32),
            jax.ShapeDtypeStruct((N_LAYERS, N_KV_HEADS * BATCH, HEAD_DIM), jnp.float32),
        ),
        compiler_params=pltpu.CompilerParams(
            dimension_semantics=("arbitrary",)),   # layers are sequential (h carry)
    )(sp, h0, cos, sin, cache_k, cache_v,
      params["attn_norm"], params["wqkv_t"], params["wo_t"], params["ff_norm"],
      params["w1_t"], params["w3_t"], params["w2_t"],
      params["final_norm"], params["output_t"])

    # In-place KV cache scatter at start_pos (caches are donated -> no copy).
    z = jnp.int32(0)
    idx = (z, z, start_pos.astype(jnp.int32), z)
    new_ck = jax.lax.dynamic_update_slice(cache_k, k_rows[:, :, None, :], idx)
    new_cv = jax.lax.dynamic_update_slice(cache_v, v_rows[:, :, None, :], idx)
    return logits[:, None, :], new_ck, new_cv


# --------------------------- parameter init -------------------------------
def init_params(key):
    def dense(k, shape, scale=0.02):
        return scale * jax.random.normal(k, shape, dtype=jnp.float32)

    # Per-head column permutation converting the interleaved (even, odd) RoPE
    # pairing into a half-rotated [evens | odds] layout.  Applied identically to
    # wq and wk, so q.k dot products (and therefore all outputs) are unchanged.
    perm = jnp.concatenate([jnp.arange(0, HEAD_DIM, 2), jnp.arange(1, HEAD_DIM, 2)])

    def permute_heads(w_t, n_heads):
        cols = (jnp.arange(n_heads)[:, None] * HEAD_DIM + perm[None, :]).reshape(-1)
        return w_t[:, cols]

    keys = jax.random.split(key, 2 + 7 * N_LAYERS)
    ki = iter(range(len(keys)))
    embed = dense(keys[next(ki)], (VOCAB, DIM))
    output_t = dense(keys[next(ki)], (VOCAB, DIM)).T          # (D, V)

    wqkv, wo, w1, w2, w3 = [], [], [], [], []
    for _ in range(N_LAYERS):
        wq = dense(keys[next(ki)], (Q_DIM, DIM))
        wk = dense(keys[next(ki)], (KV_DIM, DIM))
        wv = dense(keys[next(ki)], (KV_DIM, DIM))
        wo_l = dense(keys[next(ki)], (DIM, Q_DIM))
        w1_l = dense(keys[next(ki)], (HIDDEN_DIM, DIM))
        w2_l = dense(keys[next(ki)], (DIM, HIDDEN_DIM))
        w3_l = dense(keys[next(ki)], (HIDDEN_DIM, DIM))
        wqkv.append(jnp.concatenate(
            [permute_heads(wq.T, N_HEADS),
             permute_heads(wk.T, N_KV_HEADS),
             wv.T], axis=1))                                  # (D, 128) lane-dense
        wo.append(wo_l.T)
        w1.append(w1_l.T)
        w2.append(w2_l.T)
        w3.append(w3_l.T)

    return {
        "embed": embed,
        "output_t": output_t,
        "final_norm": jnp.ones((1, DIM), jnp.float32),
        "attn_norm": jnp.ones((N_LAYERS, 1, DIM), jnp.float32),
        "ff_norm": jnp.ones((N_LAYERS, 1, DIM), jnp.float32),
        "wqkv_t": jnp.stack(wqkv),                            # (L, D, 128)
        "wo_t": jnp.stack(wo),                                # (L, D, D)
        "w1_t": jnp.stack(w1),                                # (L, D, H)
        "w2_t": jnp.stack(w2),                                # (L, H, D)
        "w3_t": jnp.stack(w3),                                # (L, D, H)
    }


# -------------------------------- main ------------------------------------
if __name__ == "__main__":
    key = jax.random.PRNGKey(0)
    pkey, tkey = jax.random.split(key)
    params = init_params(pkey)

    tokens = jax.random.randint(tkey, (BATCH, 1), 0, VOCAB, dtype=jnp.int32)
    start_pos = jnp.int32(3)   # decode position; earlier cache slots are zero (as in the module)

    # KV cache layout: (layer, kv_head*batch, max_seq_len, head_dim) -- head-major,
    # position-contiguous so the per-layer slab is a single rectangular DMA.
    cache_k = jnp.zeros((N_LAYERS, N_KV_HEADS * BATCH, MAX_SEQ_LEN, HEAD_DIM), jnp.float32)
    cache_v = jnp.zeros((N_LAYERS, N_KV_HEADS * BATCH, MAX_SEQ_LEN, HEAD_DIM), jnp.float32)

    freqs_cos, freqs_sin = precompute_freqs(HEAD_DIM, MAX_SEQ_LEN * 2)

    logits, cache_k, cache_v = transformer_forward(
        params, tokens, start_pos, cache_k, cache_v, freqs_cos, freqs_sin)

    jax.block_until_ready(logits)
    assert logits.shape == (BATCH, 1, VOCAB) and logits.dtype == jnp.float32
    print("KERNEL_OK")
</pallas_src>

<mosaic_0001>
module attributes {stable_mosaic.version = 11 : i64} {
  func.func @decode_kernel(%arg0: i32, %arg1: memref<1xi32, #tpu.memory_space<smem>>, %arg2: memref<2x64xf32, #tpu.memory_space<vmem>>, %arg3: memref<1x8xf32, #tpu.memory_space<vmem>>, %arg4: memref<1x8xf32, #tpu.memory_space<vmem>>, %arg5: memref<1x4x16x16xf32, #tpu.memory_space<vmem>>, %arg6: memref<1x4x16x16xf32, #tpu.memory_space<vmem>>, %arg7: memref<1x1x64xf32, #tpu.memory_space<vmem>>, %arg8: memref<1x64x128xf32, #tpu.memory_space<vmem>>, %arg9: memref<1x64x64xf32, #tpu.memory_space<vmem>>, %arg10: memref<1x1x64xf32, #tpu.memory_space<vmem>>, %arg11: memref<1x64x256xf32, #tpu.memory_space<vmem>>, %arg12: memref<1x64x256xf32, #tpu.memory_space<vmem>>, %arg13: memref<1x256x64xf32, #tpu.memory_space<vmem>>, %arg14: memref<1x64xf32, #tpu.memory_space<vmem>>, %arg15: memref<64x128xf32, #tpu.memory_space<vmem>>, %arg16: memref<2x128xf32, #tpu.memory_space<vmem>>, %arg17: memref<1x4x16xf32, #tpu.memory_space<vmem>>, %arg18: memref<1x4x16xf32, #tpu.memory_space<vmem>>, %arg19: memref<2x64xf32, #tpu.memory_space<vmem>>) attributes {dimension_semantics = [#tpu.dimension_semantics<arbitrary>], iteration_bounds = array<i64: 2>, scalar_prefetch = 1 : i64, scratch_operands = 1 : i64, tpu.core_type = #tpu.core_type<tc>, window_params = [{pipeline_mode = #tpu.pipeline_mode<synchronous>, transform_indices = @transform_0, window_bounds = array<i64: 2, 64>}, {pipeline_mode = #tpu.pipeline_mode<synchronous>, transform_indices = @transform_1, window_bounds = array<i64: 1, 8>}, {pipeline_mode = #tpu.pipeline_mode<synchronous>, transform_indices = @transform_2, window_bounds = array<i64: 1, 8>}, {transform_indices = @transform_3, window_bounds = array<i64: 1, 4, 16, 16>}, {transform_indices = @transform_4, window_bounds = array<i64: 1, 4, 16, 16>}, {transform_indices = @transform_5, window_bounds = array<i64: 1, 1, 64>}, {transform_indices = @transform_6, window_bounds = array<i64: 1, 64, 128>}, {transform_indices = @transform_7, window_bounds = array<i64: 1, 64, 64>}, {transform_indices = @transform_8, window_bounds = array<i64: 1, 1, 64>}, {transform_indices = @transform_9, window_bounds = array<i64: 1, 64, 256>}, {transform_indices = @transform_10, window_bounds = array<i64: 1, 64, 256>}, {transform_indices = @transform_11, window_bounds = array<i64: 1, 256, 64>}, {pipeline_mode = #tpu.pipeline_mode<synchronous>, transform_indices = @transform_12, window_bounds = array<i64: 1, 64>}, {pipeline_mode = #tpu.pipeline_mode<synchronous>, transform_indices = @transform_13, window_bounds = array<i64: 64, 128>}, {pipeline_mode = #tpu.pipeline_mode<synchronous>, transform_indices = @transform_14, window_bounds = array<i64: 2, 128>}, {transform_indices = @transform_15, window_bounds = array<i64: 1, 4, 16>}, {transform_indices = @transform_16, window_bounds = array<i64: 1, 4, 16>}]} {
    %c0 = arith.constant 0 : index
    %0 = memref.load %arg1[%c0] : memref<1xi32, #tpu.memory_space<smem>>
    %c0_i32 = arith.constant 0 : i32
    %1 = arith.cmpi eq, %arg0, %c0_i32 : i32
    %2 = arith.extui %1 : i1 to i32
    %c0_i32_0 = arith.constant 0 : i32
    %3 = arith.cmpi ne, %2, %c0_i32_0 : i32
    scf.if %3 {
      %c0_88 = arith.constant 0 : index
      %c0_89 = arith.constant 0 : index
      %305 = vector.load %arg2[%c0_88, %c0_89] : memref<2x64xf32, #tpu.memory_space<vmem>>, vector<2x64xf32>
      %c0_90 = arith.constant 0 : index
      %c0_91 = arith.constant 0 : index
      %306 = vector.load %arg19[%c0_90, %c0_91] : memref<2x64xf32, #tpu.memory_space<vmem>>, vector<2x64xf32>
      tpu.vector_store %arg19[%c0_90, %c0_91], %305 {strides = array<i32>} : memref<2x64xf32, #tpu.memory_space<vmem>>, vector<2x64xf32>,
    } else {
    }
    %c0_1 = arith.constant 0 : index
    %c0_2 = arith.constant 0 : index
    %4 = vector.load %arg19[%c0_1, %c0_2] : memref<2x64xf32, #tpu.memory_space<vmem>>, vector<2x64xf32>
    %5 = arith.mulf %4, %4 : vector<2x64xf32>
    %cst = arith.constant dense<0.000000e+00> : vector<2xf32>
    %6 = vector.multi_reduction <add>, %5, %cst [1] : vector<2x64xf32> to vector<2xf32>
    %7 = vector.shape_cast %6 : vector<2xf32> to vector<2x1xf32>
    %cst_3 = arith.constant 6.400000e+01 : f32
    %8 = vector.broadcast %cst_3 : f32 to vector<2x1xf32>
    %9 = arith.divf %7, %8 : vector<2x1xf32>
    %c0_4 = arith.constant 0 : index
    %c0_5 = arith.constant 0 : index
    %c0_6 = arith.constant 0 : index
    %10 = vector.load %arg7[%c0_4, %c0_5, %c0_6] : memref<1x1x64xf32, #tpu.memory_space<vmem>>, vector<1x1x64xf32>
    %11 = vector.shape_cast %10 : vector<1x1x64xf32> to vector<1x64xf32>
    %cst_7 = arith.constant 9.99999974E-6 : f32
    %12 = vector.broadcast %cst_7 : f32 to vector<2x1xf32>
    %13 = arith.addf %9, %12 : vector<2x1xf32>
    %14 = math.rsqrt %13 : vector<2x1xf32>
    %15 = vector.broadcast %14 : vector<2x1xf32> to vector<2x64xf32>
    %16 = arith.mulf %4, %15 : vector<2x64xf32>
    %17 = vector.broadcast %11 : vector<1x64xf32> to vector<2x64xf32>
    %18 = arith.mulf %17, %16 : vector<2x64xf32>
    %c0_8 = arith.constant 0 : index
    %c0_9 = arith.constant 0 : index
    %c0_10 = arith.constant 0 : index
    %19 = vector.load %arg8[%c0_8, %c0_9, %c0_10] : memref<1x64x128xf32, #tpu.memory_space<vmem>>, vector<1x64x128xf32>
    %20 = vector.shape_cast %19 : vector<1x64x128xf32> to vector<64x128xf32>
    %cst_11 = arith.constant dense<0.000000e+00> : vector<2x128xf32>
    %21 = tpu.matmul %18, %20, %cst_11 {dimension_numbers = #tpu.dot_dimension_numbers<[1], [0], [0], [1], [0, 0, 1, 1], [], []>} : vector<2x64xf32>, vector<64x128xf32>, vector<2x128xf32> -> vector<2x128xf32>
    %c0_12 = arith.constant 0 : index
    %c0_13 = arith.constant 0 : index
    %22 = vector.load %arg3[%c0_12, %c0_13] : memref<1x8xf32, #tpu.memory_space<vmem>>, vector<1x8xf32>
    %c0_14 = arith.constant 0 : index
    %c0_15 = arith.constant 0 : index
    %23 = vector.load %arg4[%c0_14, %c0_15] : memref<1x8xf32, #tpu.memory_space<vmem>>, vector<1x8xf32>
    %24 = vector.extract_strided_slice %21 {offsets = [0, 64], sizes = [2, 16], strides = [1, 1]} : vector<2x128xf32> to vector<2x16xf32>
    %25 = vector.extract_strided_slice %24 {offsets = [0, 0], sizes = [2, 8], strides = [1, 1]} : vector<2x16xf32> to vector<2x8xf32>
    %26 = vector.extract_strided_slice %24 {offsets = [0, 8], sizes = [2, 8], strides = [1, 1]} : vector<2x16xf32> to vector<2x8xf32>
    %27 = vector.broadcast %22 : vector<1x8xf32> to vector<2x8xf32>
    %28 = arith.mulf %25, %27 : vector<2x8xf32>
    %29 = vector.broadcast %23 : vector<1x8xf32> to vector<2x8xf32>
    %30 = arith.mulf %26, %29 : vector<2x8xf32>
    %31 = arith.subf %28, %30 : vector<2x8xf32>
    %32 = vector.broadcast %23 : vector<1x8xf32> to vector<2x8xf32>
    %33 = arith.mulf %25, %32 : vector<2x8xf32>
    %34 = vector.broadcast %22 : vector<1x8xf32> to vector<2x8xf32>
    %35 = arith.mulf %26, %34 : vector<2x8xf32>
    %36 = arith.addf %33, %35 : vector<2x8xf32>
    %37 = tpu.concatenate %31, %36 in 1 : vector<2x8xf32>, vector<2x8xf32> -> vector<2x16xf32>
    %38 = vector.extract_strided_slice %21 {offsets = [0, 96], sizes = [2, 16], strides = [1, 1]} : vector<2x128xf32> to vector<2x16xf32>
    %39 = vector.extract_strided_slice %21 {offsets = [0, 80], sizes = [2, 16], strides = [1, 1]} : vector<2x128xf32> to vector<2x16xf32>
    %40 = vector.extract_strided_slice %39 {offsets = [0, 0], sizes = [2, 8], strides = [1, 1]} : vector<2x16xf32> to vector<2x8xf32>
    %41 = vector.extract_strided_slice %39 {offsets = [0, 8], sizes = [2, 8], strides = [1, 1]} : vector<2x16xf32> to vector<2x8xf32>
    %42 = vector.broadcast %22 : vector<1x8xf32> to vector<2x8xf32>
    %43 = arith.mulf %40, %42 : vector<2x8xf32>
    %44 = vector.broadcast %23 : vector<1x8xf32> to vector<2x8xf32>
    %45 = arith.mulf %41, %44 : vector<2x8xf32>
    %46 = arith.subf %43, %45 : vector<2x8xf32>
    %47 = vector.broadcast %23 : vector<1x8xf32> to vector<2x8xf32>
    %48 = arith.mulf %40, %47 : vector<2x8xf32>
    %49 = vector.broadcast %22 : vector<1x8xf32> to vector<2x8xf32>
    %50 = arith.mulf %41, %49 : vector<2x8xf32>
    %51 = arith.addf %48, %50 : vector<2x8xf32>
    %52 = tpu.concatenate %46, %51 in 1 : vector<2x8xf32>, vector<2x8xf32> -> vector<2x16xf32>
    %53 = vector.extract_strided_slice %21 {offsets = [0, 112], sizes = [2, 16], strides = [1, 1]} : vector<2x128xf32> to vector<2x16xf32>
    %54 = tpu.concatenate %37, %52 in 0 : vector<2x16xf32>, vector<2x16xf32> -> vector<4x16xf32>
    %c0_16 = arith.constant 0 : index
    %c0_17 = arith.constant 0 : index
    %c0_18 = arith.constant 0 : index
    %55 = vector.load %arg17[%c0_16, %c0_17, %c0_18] : memref<1x4x16xf32, #tpu.memory_space<vmem>>, vector<1x4x16xf32>
    %56 = vector.shape_cast %55 : vector<1x4x16xf32> to vector<4x16xf32>
    %57 = vector.shape_cast %54 : vector<4x16xf32> to vector<1x4x16xf32>
    tpu.vector_store %arg17[%c0_16, %c0_17, %c0_18], %57 {strides = array<i32>} : memref<1x4x16xf32, #tpu.memory_space<vmem>>, vector<1x4x16xf32>,
    %58 = tpu.concatenate %38, %53 in 0 : vector<2x16xf32>, vector<2x16xf32> -> vector<4x16xf32>
    %c0_19 = arith.constant 0 : index
    %c0_20 = arith.constant 0 : index
    %c0_21 = arith.constant 0 : index
    %59 = vector.load %arg18[%c0_19, %c0_20, %c0_21] : memref<1x4x16xf32, #tpu.memory_space<vmem>>, vector<1x4x16xf32>
    %60 = vector.shape_cast %59 : vector<1x4x16xf32> to vector<4x16xf32>
    %61 = vector.shape_cast %58 : vector<4x16xf32> to vector<1x4x16xf32>
    tpu.vector_store %arg18[%c0_19, %c0_20, %c0_21], %61 {strides = array<i32>} : memref<1x4x16xf32, #tpu.memory_space<vmem>>, vector<1x4x16xf32>,
    %c0_22 = arith.constant 0 : index
    %c0_23 = arith.constant 0 : index
    %c0_24 = arith.constant 0 : index
    %c0_25 = arith.constant 0 : index
    %62 = vector.load %arg5[%c0_22, %c0_23, %c0_24, %c0_25] : memref<1x4x16x16xf32, #tpu.memory_space<vmem>>, vector<1x4x16x16xf32>
    %63 = vector.shape_cast %62 : vector<1x4x16x16xf32> to vector<4x16x16xf32>
    %c0_26 = arith.constant 0 : index
    %c0_27 = arith.constant 0 : index
    %c0_28 = arith.constant 0 : index
    %c0_29 = arith.constant 0 : index
    %64 = vector.load %arg6[%c0_26, %c0_27, %c0_28, %c0_29] : memref<1x4x16x16xf32, #tpu.memory_space<vmem>>, vector<1x4x16x16xf32>
    %65 = vector.shape_cast %64 : vector<1x4x16x16xf32> to vector<4x16x16xf32>
    %66 = tpu.iota {dimensions = array<i32: 2>} : vector<2x1x16xi32>
    %67 = vector.broadcast %0 : i32 to vector<2x1x16xi32>
    %68 = arith.cmpi slt, %66, %67 : vector<2x1x16xi32>
    %69 = vector.extract_strided_slice %63 {offsets = [0, 0, 0], sizes = [2, 16, 16], strides = [1, 1, 1]} : vector<4x16x16xf32> to vector<2x16x16xf32>
    %70 = vector.extract_strided_slice %65 {offsets = [0, 0, 0], sizes = [2, 16, 16], strides = [1, 1, 1]} : vector<4x16x16xf32> to vector<2x16x16xf32>
    %71 = vector.extract_strided_slice %21 {offsets = [0, 0], sizes = [2, 16], strides = [1, 1]} : vector<2x128xf32> to vector<2x16xf32>
    %72 = vector.extract_strided_slice %71 {offsets = [0, 0], sizes = [2, 8], strides = [1, 1]} : vector<2x16xf32> to vector<2x8xf32>
    %73 = vector.extract_strided_slice %71 {offsets = [0, 8], sizes = [2, 8], strides = [1, 1]} : vector<2x16xf32> to vector<2x8xf32>
    %74 = vector.broadcast %22 : vector<1x8xf32> to vector<2x8xf32>
    %75 = arith.mulf %72, %74 : vector<2x8xf32>
    %76 = vector.broadcast %23 : vector<1x8xf32> to vector<2x8xf32>
    %77 = arith.mulf %73, %76 : vector<2x8xf32>
    %78 = arith.subf %75, %77 : vector<2x8xf32>
    %79 = vector.broadcast %23 : vector<1x8xf32> to vector<2x8xf32>
    %80 = arith.mulf %72, %79 : vector<2x8xf32>
    %81 = vector.broadcast %22 : vector<1x8xf32> to vector<2x8xf32>
    %82 = arith.mulf %73, %81 : vector<2x8xf32>
    %83 = arith.addf %80, %82 : vector<2x8xf32>
    %84 = tpu.concatenate %78, %83 in 1 : vector<2x8xf32>, vector<2x8xf32> -> vector<2x16xf32>
    %85 = vector.shape_cast %84 : vector<2x16xf32> to vector<2x1x16xf32>
    "tpu.trace_start"() <{level = 10 : i32, message = "bqd,bsd->bqs"}> : () -> ()
    %cst_30 = arith.constant dense<0.000000e+00> : vector<2x1x16xf32>
    %86 = tpu.matmul %85, %69, %cst_30 {dimension_numbers = #tpu.dot_dimension_numbers<[2], [2], [1], [1], [0, 0, 0, 1, 1, 1], [0], [0]>} : vector<2x1x16xf32>, vector<2x16x16xf32>, vector<2x1x16xf32> -> vector<2x1x16xf32>
    "tpu.trace_stop"() : () -> ()
    %cst_31 = arith.constant 2.500000e-01 : f32
    %87 = vector.broadcast %cst_31 : f32 to vector<2x1x16xf32>
    %88 = arith.mulf %86, %87 : vector<2x1x16xf32>
    %cst_32 = arith.constant -1.000000e+30 : f32
    %89 = vector.broadcast %cst_32 : f32 to vector<2x1x16xf32>
    %90 = arith.select %68, %88, %89 : vector<2x1x16xi1>, vector<2x1x16xf32>
    %91 = vector.shape_cast %37 : vector<2x16xf32> to vector<2x1x16xf32>
    %92 = arith.mulf %85, %91 : vector<2x1x16xf32>
    %cst_33 = arith.constant dense<0.000000e+00> : vector<2x1xf32>
    %93 = vector.multi_reduction <add>, %92, %cst_33 [2] : vector<2x1x16xf32> to vector<2x1xf32>
    %94 = vector.shape_cast %93 : vector<2x1xf32> to vector<2x1x1xf32>
    %cst_34 = arith.constant 2.500000e-01 : f32
    %95 = vector.broadcast %cst_34 : f32 to vector<2x1x1xf32>
    %96 = arith.mulf %94, %95 : vector<2x1x1xf32>
    %cst_35 = arith.constant dense<0xFF800000> : vector<2x1xf32>
    %97 = vector.multi_reduction <maximumf>, %90, %cst_35 [2] : vector<2x1x16xf32> to vector<2x1xf32>
    %98 = vector.shape_cast %97 : vector<2x1xf32> to vector<2x1x1xf32>
    %99 = arith.maximumf %98, %96 : vector<2x1x1xf32>
    %100 = vector.broadcast %99 : vector<2x1x1xf32> to vector<2x1x16xf32>
    %101 = arith.subf %90, %100 : vector<2x1x16xf32>
    %102 = math.exp %101 : vector<2x1x16xf32>
    %103 = arith.subf %96, %99 : vector<2x1x1xf32>
    %104 = math.exp %103 : vector<2x1x1xf32>
    %cst_36 = arith.constant dense<0.000000e+00> : vector<2x1xf32>
    %105 = vector.multi_reduction <add>, %102, %cst_36 [2] : vector<2x1x16xf32> to vector<2x1xf32>
    %106 = vector.shape_cast %105 : vector<2x1xf32> to vector<2x1x1xf32>
    %107 = arith.addf %106, %104 : vector<2x1x1xf32>
    %108 = tpu.reciprocal %107 {approx = true} : vector<2x1x1xf32> -> vector<2x1x1xf32>
    "tpu.trace_start"() <{level = 10 : i32, message = "bqs,bsd->bqd"}> : () -> ()
    %cst_37 = arith.constant dense<0.000000e+00> : vector<2x1x16xf32>
    %109 = tpu.matmul %102, %70, %cst_37 {dimension_numbers = #tpu.dot_dimension_numbers<[2], [1], [1], [2], [0, 0, 0, 1, 1, 2], [0], [0]>} : vector<2x1x16xf32>, vector<2x16x16xf32>, vector<2x1x16xf32> -> vector<2x1x16xf32>
    "tpu.trace_stop"() : () -> ()
    %110 = vector.broadcast %108 : vector<2x1x1xf32> to vector<2x1x16xf32>
    %111 = arith.mulf %109, %110 : vector<2x1x16xf32>
    %112 = arith.mulf %104, %108 : vector<2x1x1xf32>
    %113 = vector.shape_cast %38 : vector<2x16xf32> to vector<2x1x16xf32>
    %114 = vector.broadcast %112 : vector<2x1x1xf32> to vector<2x1x16xf32>
    %115 = arith.mulf %114, %113 : vector<2x1x16xf32>
    %116 = arith.addf %111, %115 : vector<2x1x16xf32>
    %117 = vector.shape_cast %116 : vector<2x1x16xf32> to vector<2x16xf32>
    %118 = vector.extract_strided_slice %63 {offsets = [0, 0, 0], sizes = [2, 16, 16], strides = [1, 1, 1]} : vector<4x16x16xf32> to vector<2x16x16xf32>
    %119 = vector.extract_strided_slice %65 {offsets = [0, 0, 0], sizes = [2, 16, 16], strides = [1, 1, 1]} : vector<4x16x16xf32> to vector<2x16x16xf32>
    %120 = vector.extract_strided_slice %21 {offsets = [0, 16], sizes = [2, 16], strides = [1, 1]} : vector<2x128xf32> to vector<2x16xf32>
    %121 = vector.extract_strided_slice %120 {offsets = [0, 0], sizes = [2, 8], strides = [1, 1]} : vector<2x16xf32> to vector<2x8xf32>
    %122 = vector.extract_strided_slice %120 {offsets = [0, 8], sizes = [2, 8], strides = [1, 1]} : vector<2x16xf32> to vector<2x8xf32>
    %123 = vector.broadcast %22 : vector<1x8xf32> to vector<2x8xf32>
    %124 = arith.mulf %121, %123 : vector<2x8xf32>
    %125 = vector.broadcast %23 : vector<1x8xf32> to vector<2x8xf32>
    %126 = arith.mulf %122, %125 : vector<2x8xf32>
    %127 = arith.subf %124, %126 : vector<2x8xf32>
    %128 = vector.broadcast %23 : vector<1x8xf32> to vector<2x8xf32>
    %129 = arith.mulf %121, %128 : vector<2x8xf32>
    %130 = vector.broadcast %22 : vector<1x8xf32> to vector<2x8xf32>
    %131 = arith.mulf %122, %130 : vector<2x8xf32>
    %132 = arith.addf %129, %131 : vector<2x8xf32>
    %133 = tpu.concatenate %127, %132 in 1 : vector<2x8xf32>, vector<2x8xf32> -> vector<2x16xf32>
    %134 = vector.shape_cast %133 : vector<2x16xf32> to vector<2x1x16xf32>
    "tpu.trace_start"() <{level = 10 : i32, message = "bqd,bsd->bqs"}> : () -> ()
    %cst_38 = arith.constant dense<0.000000e+00> : vector<2x1x16xf32>
    %135 = tpu.matmul %134, %118, %cst_38 {dimension_numbers = #tpu.dot_dimension_numbers<[2], [2], [1], [1], [0, 0, 0, 1, 1, 1], [0], [0]>} : vector<2x1x16xf32>, vector<2x16x16xf32>, vector<2x1x16xf32> -> vector<2x1x16xf32>
    "tpu.trace_stop"() : () -> ()
    %cst_39 = arith.constant 2.500000e-01 : f32
    %136 = vector.broadcast %cst_39 : f32 to vector<2x1x16xf32>
    %137 = arith.mulf %135, %136 : vector<2x1x16xf32>
    %cst_40 = arith.constant -1.000000e+30 : f32
    %138 = vector.broadcast %cst_40 : f32 to vector<2x1x16xf32>
    %139 = arith.select %68, %137, %138 : vector<2x1x16xi1>, vector<2x1x16xf32>
    %140 = vector.shape_cast %37 : vector<2x16xf32> to vector<2x1x16xf32>
    %141 = arith.mulf %134, %140 : vector<2x1x16xf32>
    %cst_41 = arith.constant dense<0.000000e+00> : vector<2x1xf32>
    %142 = vector.multi_reduction <add>, %141, %cst_41 [2] : vector<2x1x16xf32> to vector<2x1xf32>
    %143 = vector.shape_cast %142 : vector<2x1xf32> to vector<2x1x1xf32>
    %cst_42 = arith.constant 2.500000e-01 : f32
    %144 = vector.broadcast %cst_42 : f32 to vector<2x1x1xf32>
    %145 = arith.mulf %143, %144 : vector<2x1x1xf32>
    %cst_43 = arith.constant dense<0xFF800000> : vector<2x1xf32>
    %146 = vector.multi_reduction <maximumf>, %139, %cst_43 [2] : vector<2x1x16xf32> to vector<2x1xf32>
    %147 = vector.shape_cast %146 : vector<2x1xf32> to vector<2x1x1xf32>
    %148 = arith.maximumf %147, %145 : vector<2x1x1xf32>
    %149 = vector.broadcast %148 : vector<2x1x1xf32> to vector<2x1x16xf32>
    %150 = arith.subf %139, %149 : vector<2x1x16xf32>
    %151 = math.exp %150 : vector<2x1x16xf32>
    %152 = arith.subf %145, %148 : vector<2x1x1xf32>
    %153 = math.exp %152 : vector<2x1x1xf32>
    %cst_44 = arith.constant dense<0.000000e+00> : vector<2x1xf32>
    %154 = vector.multi_reduction <add>, %151, %cst_44 [2] : vector<2x1x16xf32> to vector<2x1xf32>
    %155 = vector.shape_cast %154 : vector<2x1xf32> to vector<2x1x1xf32>
    %156 = arith.addf %155, %153 : vector<2x1x1xf32>
    %157 = tpu.reciprocal %156 {approx = true} : vector<2x1x1xf32> -> vector<2x1x1xf32>
    "tpu.trace_start"() <{level = 10 : i32, message = "bqs,bsd->bqd"}> : () -> ()
    %cst_45 = arith.constant dense<0.000000e+00> : vector<2x1x16xf32>
    %158 = tpu.matmul %151, %119, %cst_45 {dimension_numbers = #tpu.dot_dimension_numbers<[2], [1], [1], [2], [0, 0, 0, 1, 1, 2], [0], [0]>} : vector<2x1x16xf32>, vector<2x16x16xf32>, vector<2x1x16xf32> -> vector<2x1x16xf32>
    "tpu.trace_stop"() : () -> ()
    %159 = vector.broadcast %157 : vector<2x1x1xf32> to vector<2x1x16xf32>
    %160 = arith.mulf %158, %159 : vector<2x1x16xf32>
    %161 = arith.mulf %153, %157 : vector<2x1x1xf32>
    %162 = vector.shape_cast %38 : vector<2x16xf32> to vector<2x1x16xf32>
    %163 = vector.broadcast %161 : vector<2x1x1xf32> to vector<2x1x16xf32>
    %164 = arith.mulf %163, %162 : vector<2x1x16xf32>
    %165 = arith.addf %160, %164 : vector<2x1x16xf32>
    %166 = vector.shape_cast %165 : vector<2x1x16xf32> to vector<2x16xf32>
    %167 = vector.extract_strided_slice %63 {offsets = [2, 0, 0], sizes = [2, 16, 16], strides = [1, 1, 1]} : vector<4x16x16xf32> to vector<2x16x16xf32>
    %168 = vector.extract_strided_slice %65 {offsets = [2, 0, 0], sizes = [2, 16, 16], strides = [1, 1, 1]} : vector<4x16x16xf32> to vector<2x16x16xf32>
    %169 = vector.extract_strided_slice %21 {offsets = [0, 32], sizes = [2, 16], strides = [1, 1]} : vector<2x128xf32> to vector<2x16xf32>
    %170 = vector.extract_strided_slice %169 {offsets = [0, 0], sizes = [2, 8], strides = [1, 1]} : vector<2x16xf32> to vector<2x8xf32>
    %171 = vector.extract_strided_slice %169 {offsets = [0, 8], sizes = [2, 8], strides = [1, 1]} : vector<2x16xf32> to vector<2x8xf32>
    %172 = vector.broadcast %22 : vector<1x8xf32> to vector<2x8xf32>
    %173 = arith.mulf %170, %172 : vector<2x8xf32>
    %174 = vector.broadcast %23 : vector<1x8xf32> to vector<2x8xf32>
    %175 = arith.mulf %171, %174 : vector<2x8xf32>
    %176 = arith.subf %173, %175 : vector<2x8xf32>
    %177 = vector.broadcast %23 : vector<1x8xf32> to vector<2x8xf32>
    %178 = arith.mulf %170, %177 : vector<2x8xf32>
    %179 = vector.broadcast %22 : vector<1x8xf32> to vector<2x8xf32>
    %180 = arith.mulf %171, %179 : vector<2x8xf32>
    %181 = arith.addf %178, %180 : vector<2x8xf32>
    %182 = tpu.concatenate %176, %181 in 1 : vector<2x8xf32>, vector<2x8xf32> -> vector<2x16xf32>
    %183 = vector.shape_cast %182 : vector<2x16xf32> to vector<2x1x16xf32>
    "tpu.trace_start"() <{level = 10 : i32, message = "bqd,bsd->bqs"}> : () -> ()
    %cst_46 = arith.constant dense<0.000000e+00> : vector<2x1x16xf32>
    %184 = tpu.matmul %183, %167, %cst_46 {dimension_numbers = #tpu.dot_dimension_numbers<[2], [2], [1], [1], [0, 0, 0, 1, 1, 1], [0], [0]>} : vector<2x1x16xf32>, vector<2x16x16xf32>, vector<2x1x16xf32> -> vector<2x1x16xf32>
    "tpu.trace_stop"() : () -> ()
    %cst_47 = arith.constant 2.500000e-01 : f32
    %185 = vector.broadcast %cst_47 : f32 to vector<2x1x16xf32>
    %186 = arith.mulf %184, %185 : vector<2x1x16xf32>
    %cst_48 = arith.constant -1.000000e+30 : f32
    %187 = vector.broadcast %cst_48 : f32 to vector<2x1x16xf32>
    %188 = arith.select %68, %186, %187 : vector<2x1x16xi1>, vector<2x1x16xf32>
    %189 = vector.shape_cast %52 : vector<2x16xf32> to vector<2x1x16xf32>
    %190 = arith.mulf %183, %189 : vector<2x1x16xf32>
    %cst_49 = arith.constant dense<0.000000e+00> : vector<2x1xf32>
    %191 = vector.multi_reduction <add>, %190, %cst_49 [2] : vector<2x1x16xf32> to vector<2x1xf32>
    %192 = vector.shape_cast %191 : vector<2x1xf32> to vector<2x1x1xf32>
    %cst_50 = arith.constant 2.500000e-01 : f32
    %193 = vector.broadcast %cst_50 : f32 to vector<2x1x1xf32>
    %194 = arith.mulf %192, %193 : vector<2x1x1xf32>
    %cst_51 = arith.constant dense<0xFF800000> : vector<2x1xf32>
    %195 = vector.multi_reduction <maximumf>, %188, %cst_51 [2] : vector<2x1x16xf32> to vector<2x1xf32>
    %196 = vector.shape_cast %195 : vector<2x1xf32> to vector<2x1x1xf32>
    %197 = arith.maximumf %196, %194 : vector<2x1x1xf32>
    %198 = vector.broadcast %197 : vector<2x1x1xf32> to vector<2x1x16xf32>
    %199 = arith.subf %188, %198 : vector<2x1x16xf32>
    %200 = math.exp %199 : vector<2x1x16xf32>
    %201 = arith.subf %194, %197 : vector<2x1x1xf32>
    %202 = math.exp %201 : vector<2x1x1xf32>
    %cst_52 = arith.constant dense<0.000000e+00> : vector<2x1xf32>
    %203 = vector.multi_reduction <add>, %200, %cst_52 [2] : vector<2x1x16xf32> to vector<2x1xf32>
    %204 = vector.shape_cast %203 : vector<2x1xf32> to vector<2x1x1xf32>
    %205 = arith.addf %204, %202 : vector<2x1x1xf32>
    %206 = tpu.reciprocal %205 {approx = true} : vector<2x1x1xf32> -> vector<2x1x1xf32>
    "tpu.trace_start"() <{level = 10 : i32, message = "bqs,bsd->bqd"}> : () -> ()
    %cst_53 = arith.constant dense<0.000000e+00> : vector<2x1x16xf32>
    %207 = tpu.matmul %200, %168, %cst_53 {dimension_numbers = #tpu.dot_dimension_numbers<[2], [1], [1], [2], [0, 0, 0, 1, 1, 2], [0], [0]>} : vector<2x1x16xf32>, vector<2x16x16xf32>, vector<2x1x16xf32> -> vector<2x1x16xf32>
    "tpu.trace_stop"() : () -> ()
    %208 = vector.broadcast %206 : vector<2x1x1xf32> to vector<2x1x16xf32>
    %209 = arith.mulf %207, %208 : vector<2x1x16xf32>
    %210 = arith.mulf %202, %206 : vector<2x1x1xf32>
    %211 = vector.shape_cast %53 : vector<2x16xf32> to vector<2x1x16xf32>
    %212 = vector.broadcast %210 : vector<2x1x1xf32> to vector<2x1x16xf32>
    %213 = arith.mulf %212, %211 : vector<2x1x16xf32>
    %214 = arith.addf %209, %213 : vector<2x1x16xf32>
    %215 = vector.shape_cast %214 : vector<2x1x16xf32> to vector<2x16xf32>
    %216 = vector.extract_strided_slice %63 {offsets = [2, 0, 0], sizes = [2, 16, 16], strides = [1, 1, 1]} : vector<4x16x16xf32> to vector<2x16x16xf32>
    %217 = vector.extract_strided_slice %65 {offsets = [2, 0, 0], sizes = [2, 16, 16], strides = [1, 1, 1]} : vector<4x16x16xf32> to vector<2x16x16xf32>
    %218 = vector.extract_strided_slice %21 {offsets = [0, 48], sizes = [2, 16], strides = [1, 1]} : vector<2x128xf32> to vector<2x16xf32>
    %219 = vector.extract_strided_slice %218 {offsets = [0, 0], sizes = [2, 8], strides = [1, 1]} : vector<2x16xf32> to vector<2x8xf32>
    %220 = vector.extract_strided_slice %218 {offsets = [0, 8], sizes = [2, 8], strides = [1, 1]} : vector<2x16xf32> to vector<2x8xf32>
    %221 = vector.broadcast %22 : vector<1x8xf32> to vector<2x8xf32>
    %222 = arith.mulf %219, %221 : vector<2x8xf32>
    %223 = vector.broadcast %23 : vector<1x8xf32> to vector<2x8xf32>
    %224 = arith.mulf %220, %223 : vector<2x8xf32>
    %225 = arith.subf %222, %224 : vector<2x8xf32>
    %226 = vector.broadcast %23 : vector<1x8xf32> to vector<2x8xf32>
    %227 = arith.mulf %219, %226 : vector<2x8xf32>
    %228 = vector.broadcast %22 : vector<1x8xf32> to vector<2x8xf32>
    %229 = arith.mulf %220, %228 : vector<2x8xf32>
    %230 = arith.addf %227, %229 : vector<2x8xf32>
    %231 = tpu.concatenate %225, %230 in 1 : vector<2x8xf32>, vector<2x8xf32> -> vector<2x16xf32>
    %232 = vector.shape_cast %231 : vector<2x16xf32> to vector<2x1x16xf32>
    "tpu.trace_start"() <{level = 10 : i32, message = "bqd,bsd->bqs"}> : () -> ()
    %cst_54 = arith.constant dense<0.000000e+00> : vector<2x1x16xf32>
    %233 = tpu.matmul %232, %216, %cst_54 {dimension_numbers = #tpu.dot_dimension_numbers<[2], [2], [1], [1], [0, 0, 0, 1, 1, 1], [0], [0]>} : vector<2x1x16xf32>, vector<2x16x16xf32>, vector<2x1x16xf32> -> vector<2x1x16xf32>
    "tpu.trace_stop"() : () -> ()
    %cst_55 = arith.constant 2.500000e-01 : f32
    %234 = vector.broadcast %cst_55 : f32 to vector<2x1x16xf32>
    %235 = arith.mulf %233, %234 : vector<2x1x16xf32>
    %cst_56 = arith.constant -1.000000e+30 : f32
    %236 = vector.broadcast %cst_56 : f32 to vector<2x1x16xf32>
    %237 = arith.select %68, %235, %236 : vector<2x1x16xi1>, vector<2x1x16xf32>
    %238 = vector.shape_cast %52 : vector<2x16xf32> to vector<2x1x16xf32>
    %239 = arith.mulf %232, %238 : vector<2x1x16xf32>
    %cst_57 = arith.constant dense<0.000000e+00> : vector<2x1xf32>
    %240 = vector.multi_reduction <add>, %239, %cst_57 [2] : vector<2x1x16xf32> to vector<2x1xf32>
    %241 = vector.shape_cast %240 : vector<2x1xf32> to vector<2x1x1xf32>
    %cst_58 = arith.constant 2.500000e-01 : f32
    %242 = vector.broadcast %cst_58 : f32 to vector<2x1x1xf32>
    %243 = arith.mulf %241, %242 : vector<2x1x1xf32>
    %cst_59 = arith.constant dense<0xFF800000> : vector<2x1xf32>
    %244 = vector.multi_reduction <maximumf>, %237, %cst_59 [2] : vector<2x1x16xf32> to vector<2x1xf32>
    %245 = vector.shape_cast %244 : vector<2x1xf32> to vector<2x1x1xf32>
    %246 = arith.maximumf %245, %243 : vector<2x1x1xf32>
    %247 = vector.broadcast %246 : vector<2x1x1xf32> to vector<2x1x16xf32>
    %248 = arith.subf %237, %247 : vector<2x1x16xf32>
    %249 = math.exp %248 : vector<2x1x16xf32>
    %250 = arith.subf %243, %246 : vector<2x1x1xf32>
    %251 = math.exp %250 : vector<2x1x1xf32>
    %cst_60 = arith.constant dense<0.000000e+00> : vector<2x1xf32>
    %252 = vector.multi_reduction <add>, %249, %cst_60 [2] : vector<2x1x16xf32> to vector<2x1xf32>
    %253 = vector.shape_cast %252 : vector<2x1xf32> to vector<2x1x1xf32>
    %254 = arith.addf %253, %251 : vector<2x1x1xf32>
    %255 = tpu.reciprocal %254 {approx = true} : vector<2x1x1xf32> -> vector<2x1x1xf32>
    "tpu.trace_start"() <{level = 10 : i32, message = "bqs,bsd->bqd"}> : () -> ()
    %cst_61 = arith.constant dense<0.000000e+00> : vector<2x1x16xf32>
    %256 = tpu.matmul %249, %217, %cst_61 {dimension_numbers = #tpu.dot_dimension_numbers<[2], [1], [1], [2], [0, 0, 0, 1, 1, 2], [0], [0]>} : vector<2x1x16xf32>, vector<2x16x16xf32>, vector<2x1x16xf32> -> vector<2x1x16xf32>
    "tpu.trace_stop"() : () -> ()
    %257 = vector.broadcast %255 : vector<2x1x1xf32> to vector<2x1x16xf32>
    %258 = arith.mulf %256, %257 : vector<2x1x16xf32>
    %259 = arith.mulf %251, %255 : vector<2x1x1xf32>
    %260 = vector.shape_cast %53 : vector<2x16xf32> to vector<2x1x16xf32>
    %261 = vector.broadcast %259 : vector<2x1x1xf32> to vector<2x1x16xf32>
    %262 = arith.mulf %261, %260 : vector<2x1x16xf32>
    %263 = arith.addf %258, %262 : vector<2x1x16xf32>
    %264 = vector.shape_cast %263 : vector<2x1x16xf32> to vector<2x16xf32>
    %265 = tpu.concatenate %117, %166, %215, %264 in 1 : vector<2x16xf32>, vector<2x16xf32>, vector<2x16xf32>, vector<2x16xf32> -> vector<2x64xf32>
    %c0_62 = arith.constant 0 : index
    %c0_63 = arith.constant 0 : index
    %c0_64 = arith.constant 0 : index
    %266 = vector.load %arg9[%c0_62, %c0_63, %c0_64] : memref<1x64x64xf32, #tpu.memory_space<vmem>>, vector<1x64x64xf32>
    %267 = vector.shape_cast %266 : vector<1x64x64xf32> to vector<64x64xf32>
    %cst_65 = arith.constant dense<0.000000e+00> : vector<2x64xf32>
    %268 = tpu.matmul %265, %267, %cst_65 {dimension_numbers = #tpu.dot_dimension_numbers<[1], [0], [0], [1], [0, 0, 1, 1], [], []>} : vector<2x64xf32>, vector<64x64xf32>, vector<2x64xf32> -> vector<2x64xf32>
    %269 = arith.addf %4, %268 : vector<2x64xf32>
    %270 = arith.mulf %269, %269 : vector<2x64xf32>
    %cst_66 = arith.constant dense<0.000000e+00> : vector<2xf32>
    %271 = vector.multi_reduction <add>, %270, %cst_66 [1] : vector<2x64xf32> to vector<2xf32>
    %272 = vector.shape_cast %271 : vector<2xf32> to vector<2x1xf32>
    %cst_67 = arith.constant 6.400000e+01 : f32
    %273 = vector.broadcast %cst_67 : f32 to vector<2x1xf32>
    %274 = arith.divf %272, %273 : vector<2x1xf32>
    %c0_68 = arith.constant 0 : index
    %c0_69 = arith.constant 0 : index
    %c0_70 = arith.constant 0 : index
    %275 = vector.load %arg10[%c0_68, %c0_69, %c0_70] : memref<1x1x64xf32, #tpu.memory_space<vmem>>, vector<1x1x64xf32>
    %276 = vector.shape_cast %275 : vector<1x1x64xf32> to vector<1x64xf32>
    %cst_71 = arith.constant 9.99999974E-6 : f32
    %277 = vector.broadcast %cst_71 : f32 to vector<2x1xf32>
    %278 = arith.addf %274, %277 : vector<2x1xf32>
    %279 = math.rsqrt %278 : vector<2x1xf32>
    %280 = vector.broadcast %279 : vector<2x1xf32> to vector<2x64xf32>
    %281 = arith.mulf %269, %280 : vector<2x64xf32>
    %282 = vector.broadcast %276 : vector<1x64xf32> to vector<2x64xf32>
    %283 = arith.mulf %282, %281 : vector<2x64xf32>
    %c0_72 = arith.constant 0 : index
    %c0_73 = arith.constant 0 : index
    %c0_74 = arith.constant 0 : index
    %284 = vector.load %arg11[%c0_72, %c0_73, %c0_74] : memref<1x64x256xf32, #tpu.memory_space<vmem>>, vector<1x64x256xf32>
    %285 = vector.shape_cast %284 : vector<1x64x256xf32> to vector<64x256xf32>
    %cst_75 = arith.constant dense<0.000000e+00> : vector<2x256xf32>
    %286 = tpu.matmul %283, %285, %cst_75 {dimension_numbers = #tpu.dot_dimension_numbers<[1], [0], [0], [1], [0, 0, 1, 1], [], []>} : vector<2x64xf32>, vector<64x256xf32>, vector<2x256xf32> -> vector<2x256xf32>
    %c0_76 = arith.constant 0 : index
    %c0_77 = arith.constant 0 : index
    %c0_78 = arith.constant 0 : index
    %287 = vector.load %arg12[%c0_76, %c0_77, %c0_78] : memref<1x64x256xf32, #tpu.memory_space<vmem>>, vector<1x64x256xf32>
    %288 = vector.shape_cast %287 : vector<1x64x256xf32> to vector<64x256xf32>
    %cst_79 = arith.constant dense<0.000000e+00> : vector<2x256xf32>
    %289 = tpu.matmul %283, %288, %cst_79 {dimension_numbers = #tpu.dot_dimension_numbers<[1], [0], [0], [1], [0, 0, 1, 1], [], []>} : vector<2x64xf32>, vector<64x256xf32>, vector<2x256xf32> -> vector<2x256xf32>
    %290 = arith.negf %286 : vector<2x256xf32>
    %291 = math.exp %290 : vector<2x256xf32>
    %cst_80 = arith.constant 1.000000e+00 : f32
    %292 = vector.broadcast %cst_80 : f32 to vector<2x256xf32>
    %293 = arith.addf %292, %291 : vector<2x256xf32>
    %294 = arith.divf %292, %293 : vector<2x256xf32>
    %295 = arith.mulf %286, %294 : vector<2x256xf32>
    %296 = arith.mulf %295, %289 : vector<2x256xf32>
    %c0_81 = arith.constant 0 : index
    %c0_82 = arith.constant 0 : index
    %c0_83 = arith.constant 0 : index
    %297 = vector.load %arg13[%c0_81, %c0_82, %c0_83] : memref<1x256x64xf32, #tpu.memory_space<vmem>>, vector<1x256x64xf32>
    %298 = vector.shape_cast %297 : vector<1x256x64xf32> to vector<256x64xf32>
    %cst_84 = arith.constant dense<0.000000e+00> : vector<2x64xf32>
    %299 = tpu.matmul %296, %298, %cst_84 {dimension_numbers = #tpu.dot_dimension_numbers<[1], [0], [0], [1], [0, 0, 1, 1], [], []>} : vector<2x256xf32>, vector<256x64xf32>, vector<2x64xf32> -> vector<2x64xf32>
    %300 = arith.addf %269, %299 : vector<2x64xf32>
    %c0_85 = arith.constant 0 : index
    %c0_86 = arith.constant 0 : index
    %301 = vector.load %arg19[%c0_85, %c0_86] : memref<2x64xf32, #tpu.memory_space<vmem>>, vector<2x64xf32>
    tpu.vector_store %arg19[%c0_85, %c0_86], %300 {strides = array<i32>} : memref<2x64xf32, #tpu.memory_space<vmem>>, vector<2x64xf32>,
    %c1_i32 = arith.constant 1 : i32
    %302 = arith.cmpi eq, %arg0, %c1_i32 : i32
    %303 = arith.extui %302 : i1 to i32
    %c0_i32_87 = arith.constant 0 : i32
    %304 = arith.cmpi ne, %303, %c0_i32_87 : i32
    scf.if %304 {
      %305 = arith.mulf %300, %300 : vector<2x64xf32>
      %cst_88 = arith.constant dense<0.000000e+00> : vector<2xf32>
      %306 = vector.multi_reduction <add>, %305, %cst_88 [1] : vector<2x64xf32> to vector<2xf32>
      %307 = vector.shape_cast %306 : vector<2xf32> to vector<2x1xf32>
      %cst_89 = arith.constant 6.400000e+01 : f32
      %308 = vector.broadcast %cst_89 : f32 to vector<2x1xf32>
      %309 = arith.divf %307, %308 : vector<2x1xf32>
      %c0_90 = arith.constant 0 : index
      %c0_91 = arith.constant 0 : index
      %310 = vector.load %arg14[%c0_90, %c0_91] : memref<1x64xf32, #tpu.memory_space<vmem>>, vector<1x64xf32>
      %cst_92 = arith.constant 9.99999974E-6 : f32
      %311 = vector.broadcast %cst_92 : f32 to vector<2x1xf32>
      %312 = arith.addf %309, %311 : vector<2x1xf32>
      %313 = math.rsqrt %312 : vector<2x1xf32>
      %314 = vector.broadcast %313 : vector<2x1xf32> to vector<2x64xf32>
      %315 = arith.mulf %300, %314 : vector<2x64xf32>
      %316 = vector.broadcast %310 : vector<1x64xf32> to vector<2x64xf32>
      %317 = arith.mulf %316, %315 : vector<2x64xf32>
      %c0_93 = arith.constant 0 : index
      %c0_94 = arith.constant 0 : index
      %318 = vector.load %arg15[%c0_93, %c0_94] : memref<64x128xf32, #tpu.memory_space<vmem>>, vector<64x128xf32>
      %cst_95 = arith.constant dense<0.000000e+00> : vector<2x128xf32>
      %319 = tpu.matmul %317, %318, %cst_95 {dimension_numbers = #tpu.dot_dimension_numbers<[1], [0], [0], [1], [0, 0, 1, 1], [], []>} : vector<2x64xf32>, vector<64x128xf32>, vector<2x128xf32> -> vector<2x128xf32>
      %c0_96 = arith.constant 0 : index
      %c0_97 = arith.constant 0 : index
      %320 = vector.load %arg16[%c0_96, %c0_97] : memref<2x128xf32, #tpu.memory_space<vmem>>, vector<2x128xf32>
      tpu.vector_store %arg16[%c0_96, %c0_97], %319 {strides = array<i32>} : memref<2x128xf32, #tpu.memory_space<vmem>>, vector<2x128xf32>,
    } else {
    }
    return
  }
  func.func @transform_0(%arg0: i32, %arg1: memref<1xi32, #tpu.memory_space<smem>>) -> (i32, i32) {
    %c0_i32 = arith.constant 0 : i32
    %c0_i32_0 = arith.constant 0 : i32
    %c0_i32_1 = arith.constant 0 : i32
    return %c0_i32, %c0_i32_0 : i32, i32
  }
  func.func @transform_1(%arg0: i32, %arg1: memref<1xi32, #tpu.memory_space<smem>>) -> (i32, i32) {
    %c0_i32 = arith.constant 0 : i32
    %c0_i32_0 = arith.constant 0 : i32
    %c0_i32_1 = arith.constant 0 : i32
    return %c0_i32, %c0_i32_0 : i32, i32
  }
  func.func @transform_2(%arg0: i32, %arg1: memref<1xi32, #tpu.memory_space<smem>>) -> (i32, i32) {
    %c0_i32 = arith.constant 0 : i32
    %c0_i32_0 = arith.constant 0 : i32
    %c0_i32_1 = arith.constant 0 : i32
    return %c0_i32, %c0_i32_0 : i32, i32
  }
  func.func @transform_3(%arg0: i32, %arg1: memref<1xi32, #tpu.memory_space<smem>>) -> (i32, i32, i32, i32) {
    %c0_i32 = arith.constant 0 : i32
    %c0_i32_0 = arith.constant 0 : i32
    %c0_i32_1 = arith.constant 0 : i32
    %c0_i32_2 = arith.constant 0 : i32
    return %arg0, %c0_i32, %c0_i32_0, %c0_i32_1 : i32, i32, i32, i32
  }
  func.func @transform_4(%arg0: i32, %arg1: memref<1xi32, #tpu.memory_space<smem>>) -> (i32, i32, i32, i32) {
    %c0_i32 = arith.constant 0 : i32
    %c0_i32_0 = arith.constant 0 : i32
    %c0_i32_1 = arith.constant 0 : i32
    %c0_i32_2 = arith.constant 0 : i32
    return %arg0, %c0_i32, %c0_i32_0, %c0_i32_1 : i32, i32, i32, i32
  }
  func.func @transform_5(%arg0: i32, %arg1: memref<1xi32, #tpu.memory_space<smem>>) -> (i32, i32, i32) {
    %c0_i32 = arith.constant 0 : i32
    %c0_i32_0 = arith.constant 0 : i32
    %c0_i32_1 = arith.constant 0 : i32
    return %arg0, %c0_i32, %c0_i32_0 : i32, i32, i32
  }
  func.func @transform_6(%arg0: i32, %arg1: memref<1xi32, #tpu.memory_space<smem>>) -> (i32, i32, i32) {
    %c0_i32 = arith.constant 0 : i32
    %c0_i32_0 = arith.constant 0 : i32
    %c0_i32_1 = arith.constant 0 : i32
    return %arg0, %c0_i32, %c0_i32_0 : i32, i32, i32
  }
  func.func @transform_7(%arg0: i32, %arg1: memref<1xi32, #tpu.memory_space<smem>>) -> (i32, i32, i32) {
    %c0_i32 = arith.constant 0 : i32
    %c0_i32_0 = arith.constant 0 : i32
    %c0_i32_1 = arith.constant 0 : i32
    return %arg0, %c0_i32, %c0_i32_0 : i32, i32, i32
  }
  func.func @transform_8(%arg0: i32, %arg1: memref<1xi32, #tpu.memory_space<smem>>) -> (i32, i32, i32) {
    %c0_i32 = arith.constant 0 : i32
    %c0_i32_0 = arith.constant 0 : i32
    %c0_i32_1 = arith.constant 0 : i32
    return %arg0, %c0_i32, %c0_i32_0 : i32, i32, i32
  }
  func.func @transform_9(%arg0: i32, %arg1: memref<1xi32, #tpu.memory_space<smem>>) -> (i32, i32, i32) {
    %c0_i32 = arith.constant 0 : i32
    %c0_i32_0 = arith.constant 0 : i32
    %c0_i32_1 = arith.constant 0 : i32
    return %arg0, %c0_i32, %c0_i32_0 : i32, i32, i32
  }
  func.func @transform_10(%arg0: i32, %arg1: memref<1xi32, #tpu.memory_space<smem>>) -> (i32, i32, i32) {
    %c0_i32 = arith.constant 0 : i32
    %c0_i32_0 = arith.constant 0 : i32
    %c0_i32_1 = arith.constant 0 : i32
    return %arg0, %c0_i32, %c0_i32_0 : i32, i32, i32
  }
  func.func @transform_11(%arg0: i32, %arg1: memref<1xi32, #tpu.memory_space<smem>>) -> (i32, i32, i32) {
    %c0_i32 = arith.constant 0 : i32
    %c0_i32_0 = arith.constant 0 : i32
    %c0_i32_1 = arith.constant 0 : i32
    return %arg0, %c0_i32, %c0_i32_0 : i32, i32, i32
  }
  func.func @transform_12(%arg0: i32, %arg1: memref<1xi32, #tpu.memory_space<smem>>) -> (i32, i32) {
    %c0_i32 = arith.constant 0 : i32
    %c0_i32_0 = arith.constant 0 : i32
    %c0_i32_1 = arith.constant 0 : i32
    return %c0_i32, %c0_i32_0 : i32, i32
  }
  func.func @transform_13(%arg0: i32, %arg1: memref<1xi32, #tpu.memory_space<smem>>) -> (i32, i32) {
    %c0_i32 = arith.constant 0 : i32
    %c0_i32_0 = arith.constant 0 : i32
    %c0_i32_1 = arith.constant 0 : i32
    return %c0_i32, %c0_i32_0 : i32, i32
  }
  func.func @transform_14(%arg0: i32, %arg1: memref<1xi32, #tpu.memory_space<smem>>) -> (i32, i32) {
    %c0_i32 = arith.constant 0 : i32
    %c0_i32_0 = arith.constant 0 : i32
    %c0_i32_1 = arith.constant 0 : i32
    return %c0_i32, %c0_i32_0 : i32, i32
  }
  func.func @transform_15(%arg0: i32, %arg1: memref<1xi32, #tpu.memory_space<smem>>) -> (i32, i32, i32) {
    %c0_i32 = arith.constant 0 : i32
    %c0_i32_0 = arith.constant 0 : i32
    %c0_i32_1 = arith.constant 0 : i32
    return %arg0, %c0_i32, %c0_i32_0 : i32, i32, i32
  }
  func.func @transform_16(%arg0: i32, %arg1: memref<1xi32, #tpu.memory_space<smem>>) -> (i32, i32, i32) {
    %c0_i32 = arith.constant 0 : i32
    %c0_i32_0 = arith.constant 0 : i32
    %c0_i32_1 = arith.constant 0 : i32
    return %arg0, %c0_i32, %c0_i32_0 : i32, i32, i32
  }
}

</mosaic_0001>

<llo_original>
// kernel: transformer_forward.1
$region0: #{transformer_forward.1}
  #allocation0 [shape = 'u32[]', space=smem, size = 0x4, offset = 0x4, fixed_abs, tag = 'smem constant byte address 0x4 - core index']
  #allocation1 [shape = 'u32[72,128]{1,0:T(1,128)}', space=vmem, size = 0x9000, scoped, tag = 'internal scratch']
  #allocation2 [shape = 'f32[2,64]{1,0:T(2,128)}', space=vmem, size = 0x400, scoped, tag = 'scratch operand']
  #allocation3 [shape = 's32[1]{0}', space=sflag, size = 0x4, scoped, tag = 'scoped memory for transformer_forward.1']
  #allocation4 [shape = 's32[1]{0:T(128)S(6)}', space=smem, size = 0x200, scoped, tag = 'prefetched SMEM operand 0']
  %s0 = inlined_call_operand.<no memory space> [shape: s32[1], index: 0, kind: input, shape index: {}]
  %s1 = inlined_call_operand.vmem [shape: f32[2,64], index: 1, kind: input, shape index: {}]
  %s2 = inlined_call_operand.vmem [shape: f32[1,8], index: 2, kind: input, shape index: {}]
  %s3 = inlined_call_operand.vmem [shape: f32[1,8], index: 3, kind: input, shape index: {}]
  %s4 = inlined_call_operand.vmem [shape: f32[2,4,16,16], index: 4, kind: input, shape index: {}]
  %s5 = inlined_call_operand.vmem [shape: f32[2,4,16,16], index: 5, kind: input, shape index: {}]
  %s6 = inlined_call_operand.vmem [shape: f32[2,1,64], index: 6, kind: input, shape index: {}]
  %s7 = inlined_call_operand.hbm [shape: f32[2,64,128], index: 7, kind: input, shape index: {}]
  %s8 = inlined_call_operand.hbm [shape: f32[2,64,64], index: 8, kind: input, shape index: {}]
  %s9 = inlined_call_operand.vmem [shape: f32[2,1,64], index: 9, kind: input, shape index: {}]
  %s10 = inlined_call_operand.vmem [shape: f32[2,64,256], index: 10, kind: input, shape index: {}]
  %s11 = inlined_call_operand.vmem [shape: f32[2,64,256], index: 11, kind: input, shape index: {}]
  %s12 = inlined_call_operand.vmem [shape: f32[2,256,64], index: 12, kind: input, shape index: {}]
  %s13 = inlined_call_operand.vmem [shape: f32[1,64], index: 13, kind: input, shape index: {}]
  %s14 = inlined_call_operand.hbm [shape: f32[64,128], index: 14, kind: input, shape index: {}]
  %s15 = inlined_call_operand.hbm [shape: f32[2,128], index: 15, kind: output, shape index: {0}]
  %s16 = inlined_call_operand.vmem [shape: f32[2,4,16], index: 16, kind: output, shape index: {1}]
  %s17 = inlined_call_operand.vmem [shape: f32[2,4,16], index: 17, kind: output, shape index: {2}]
  %18 = xla_tuple %s15, %s16, %s17
  %s19 = sld [smem:[#allocation0]]
  $region125: #{transformer_forward.1} parent=0
    _
  %s21 = ssub.s32 1, %s19
  %s22 = scalar_select 0, %s21, %s19
  %23 = sst [smem:[#allocation4]] %s0
  $region1: #{transformer_forward.1} parent=0
    #allocation5 [shape = 'u8[65536]{0}', space=vmem, size = 0x10000, scoped, tag = 'input window, operand 7']
    #allocation6 [shape = 's32[2]{0}', space=sflag, size = 0x8, scoped, tag = 'scoped memory for transformer_forward.1']
    #allocation7 [shape = 's32[2]{0}', space=sflag, size = 0x8, scoped, tag = 'scoped memory for transformer_forward.1']
    #allocation8 [shape = 'u8[65536]{0}', space=vmem, size = 0x10000, scoped, tag = 'input window, operand 8']
    #allocation9 [shape = 's32[2]{0}', space=sflag, size = 0x8, scoped, tag = 'scoped memory for transformer_forward.1']
    #allocation10 [shape = 'u8[32768]{0}', space=vmem, size = 0x8000, scoped, tag = 'input window, operand 14, single buffered']
    #allocation11 [shape = 'u8[1024]{0}', space=vmem, size = 0x400, scoped, tag = 'output window, operand 0, single buffered']
    %24 = vsyncpa [#allocation6], 0
    %s25 = scalar_lea.sflag [#allocation6], 1
    %26 = vsyncpa %s25, 0
    %27 = vsyncpa [#allocation9], 0
    %s28 = scalar_lea.sflag [#allocation9], 1
    %29 = vsyncpa %s28, 0
    %30 = vsyncpa [#allocation7], 0
    loop: start=0, step=1, limit=4
    $region2: #{transformer_forward.1} parent=1 // loop_pre_header
      _
    $region3: #{transformer_forward.1} parent=1 // loop_header
      %s32 = sphi 0, %s36
      %p33 = scmp.ge.s32.totalorder %s32, 4
      %s40 = sphi 0, %s40
      %s42 = sphi 0, %s40
      %s43 = sphi 0, %s42
      %s57 = sphi 0, %s43
      %s61 = sphi 0, %s61
      %s63 = sphi 0, %s61
      %s64 = sphi 0, %s63
      %s78 = sphi 0, %s64
      %s82 = sphi 0, %s82
      %s84 = sphi 0, %s82
      %s85 = sphi 0, %s84
      %s99 = sphi 0, %s85
      %s105 = sphi 0, %s107
      %s108 = sphi 0, %s105
      %s109 = sphi 0, %s108
      %s125 = sphi 0, %s109
      %s131 = sphi 0, %s133
      %s134 = sphi 0, %s131
      %s135 = sphi 0, %s134
      %s151 = sphi 0, %s135
      %s157 = sphi 0, %s159
      %s160 = sphi 0, %s157
      %s161 = sphi 0, %s160
      %s177 = sphi 0, %s161
      %s183 = sphi 0, %s185
      %s186 = sphi 0, %s183
      %s187 = sphi 0, %s186
      %s203 = sphi 0, %s187
      %s209 = sphi 0, %s211
      %s212 = sphi 0, %s209
      %s213 = sphi 0, %s212
      %s229 = sphi 0, %s213
      %s235 = sphi 0, %s237
      %s238 = sphi 0, %s235
      %s239 = sphi 0, %s238
      %s255 = sphi 0, %s239
      %s261 = sphi 0, %s263
      %s264 = sphi 0, %s261
      %s265 = sphi 0, %s264
      %s281 = sphi 0, %s265
      %s287 = sphi 0, %s289
      %s290 = sphi 0, %s287
      %s291 = sphi 0, %s290
      %s307 = sphi 0, %s291
      %s313 = sphi 0, %s315
      %s316 = sphi 0, %s313
      %s317 = sphi 0, %s316
      %s333 = sphi 0, %s317
      %s337 = sphi 0, %s337
      %s339 = sphi 0, %s337
      %s340 = sphi 0, %s339
      %s354 = sphi 0, %s340
      %s358 = sphi 0, %s358
      %s360 = sphi 0, %s358
      %s361 = sphi 0, %s360
      %s375 = sphi 0, %s361
      %s379 = sphi 0, %s379
      %s381 = sphi 0, %s379
      %s382 = sphi 0, %s381
      %s396 = sphi 0, %s382
      %s402 = sphi 0, %s404
      %s405 = sphi 0, %s402
      %s406 = sphi 0, %s405
      %s422 = sphi 0, %s406
      %s428 = sphi 0, %s430
      %s431 = sphi 0, %s428
      %s432 = sphi 0, %s431
      %s448 = sphi 0, %s432
    $region4: #{transformer_forward.1} parent=1 // loop_header_branch
      %35 = sbr.rel (%p33) target = $region8
    $region5: #{transformer_forward.1} parent=1 // loop_body
      %s37 = ssub.s32 %s32, 1
      %s38 = ssub.s32 %s32, 2
      %s39 = sadd.s32 %s32, 1
      %s41 = sadd.s32 %s40, 1
      %p44 = scmp.eq.s32.totalorder %s32, 1
      %p45 = scmp.ne.s32.totalorder %s40, %s42
      %p46 = scmp.eq.s32.totalorder %s32, 0
      %p47 = por %p45, %p46
      %p48 = scmp.ne.s32.totalorder %s40, %s42
      %p49 = scmp.eq.s32.totalorder %s37, 1
      %p50 = por %p48, %p49
      %p51 = scmp.ne.s32.totalorder %s42, %s43
      %p52 = scmp.eq.s32.totalorder %s37, 0
      %p53 = por %p51, %p52
      %p54 = scmp.ne.s32.totalorder %s42, %s43
      %p55 = scmp.eq.s32.totalorder %s38, 1
      %p56 = por %p54, %p55
      %p58 = scmp.ne.s32.totalorder %s43, %s57
      %p59 = scmp.eq.s32.totalorder %s38, 0
      %p60 = por %p58, %p59
      %s62 = sadd.s32 %s61, 1
      %p65 = scmp.eq.s32.totalorder %s32, 1
      %p66 = scmp.ne.s32.totalorder %s61, %s63
      %p67 = scmp.eq.s32.totalorder %s32, 0
      %p68 = por %p66, %p67
      %p69 = scmp.ne.s32.totalorder %s61, %s63
      %p70 = scmp.eq.s32.totalorder %s37, 1
      %p71 = por %p69, %p70
      %p72 = scmp.ne.s32.totalorder %s63, %s64
      %p73 = scmp.eq.s32.totalorder %s37, 0
      %p74 = por %p72, %p73
      %p75 = scmp.ne.s32.totalorder %s63, %s64
      %p76 = scmp.eq.s32.totalorder %s38, 1
      %p77 = por %p75, %p76
      %p79 = scmp.ne.s32.totalorder %s64, %s78
      %p80 = scmp.eq.s32.totalorder %s38, 0
      %p81 = por %p79, %p80
      %s83 = sadd.s32 %s82, 1
      %p86 = scmp.eq.s32.totalorder %s32, 1
      %p87 = scmp.ne.s32.totalorder %s82, %s84
      %p88 = scmp.eq.s32.totalorder %s32, 0
      %p89 = por %p87, %p88
      %p90 = scmp.ne.s32.totalorder %s82, %s84
      %p91 = scmp.eq.s32.totalorder %s37, 1
      %p92 = por %p90, %p91
      %p93 = scmp.ne.s32.totalorder %s84, %s85
      %p94 = scmp.eq.s32.totalorder %s37, 0
      %p95 = por %p93, %p94
      %p96 = scmp.ne.s32.totalorder %s84, %s85
      %p97 = scmp.eq.s32.totalorder %s38, 1
      %p98 = por %p96, %p97
      %p100 = scmp.ne.s32.totalorder %s85, %s99
      %p101 = scmp.eq.s32.totalorder %s38, 0
      %p102 = por %p100, %p101
      %s103 = ssub.s32 %s32, %s39
      %p104 = scmp.eq.s32.totalorder %s103, 0
      %s106 = sadd.s32 %s105, 1
      %s107 = scalar_select %p104, %s105, %s106
      %p110 = pneg %p104
      %p111 = scmp.eq.s32.totalorder %s32, 1
      %p112 = por %p110, %p111
      %p113 = scmp.ne.s32.totalorder %s105, %s108
      %p114 = scmp.eq.s32.totalorder %s32, 0
      %p115 = por %p113, %p114
      %p116 = scmp.ne.s32.totalorder %s105, %s108
      %p117 = scmp.eq.s32.totalorder %s37, 1
      %p118 = por %p116, %p117
      %p119 = scmp.ne.s32.totalorder %s108, %s109
      %p120 = scmp.eq.s32.totalorder %s37, 0
      %p121 = por %p119, %p120
      %p122 = scmp.ne.s32.totalorder %s108, %s109
      %p123 = scmp.eq.s32.totalorder %s38, 1
      %p124 = por %p122, %p123
      %p126 = scmp.ne.s32.totalorder %s109, %s125
      %p127 = scmp.eq.s32.totalorder %s38, 0
      %p128 = por %p126, %p127
      %s129 = ssub.s32 %s32, %s39
      %p130 = scmp.eq.s32.totalorder %s129, 0
      %s132 = sadd.s32 %s131, 1
      %s133 = scalar_select %p130, %s131, %s132
      %p136 = pneg %p130
      %p137 = scmp.eq.s32.totalorder %s32, 1
      %p138 = por %p136, %p137
      %p139 = scmp.ne.s32.totalorder %s131, %s134
      %p140 = scmp.eq.s32.totalorder %s32, 0
      %p141 = por %p139, %p140
      %p142 = scmp.ne.s32.totalorder %s131, %s134
      %p143 = scmp.eq.s32.totalorder %s37, 1
      %p144 = por %p142, %p143
      %p145 = scmp.ne.s32.totalorder %s134, %s135
      %p146 = scmp.eq.s32.totalorder %s37, 0
      %p147 = por %p145, %p146
      %p148 = scmp.ne.s32.totalorder %s134, %s135
      %p149 = scmp.eq.s32.totalorder %s38, 1
      %p150 = por %p148, %p149
      %p152 = scmp.ne.s32.totalorder %s135, %s151
      %p153 = scmp.eq.s32.totalorder %s38, 0
      %p154 = por %p152, %p153
      %s155 = ssub.s32 %s32, %s39
      %p156 = scmp.eq.s32.totalorder %s155, 0
      %s158 = sadd.s32 %s157, 1
      %s159 = scalar_select %p156, %s157, %s158
      %p162 = pneg %p156
      %p163 = scmp.eq.s32.totalorder %s32, 1
      %p164 = por %p162, %p163
      %p165 = scmp.ne.s32.totalorder %s157, %s160
      %p166 = scmp.eq.s32.totalorder %s32, 0
      %p167 = por %p165, %p166
      %p168 = scmp.ne.s32.totalorder %s157, %s160
      %p169 = scmp.eq.s32.totalorder %s37, 1
      %p170 = por %p168, %p169
      %p171 = scmp.ne.s32.totalorder %s160, %s161
      %p172 = scmp.eq.s32.totalorder %s37, 0
      %p173 = por %p171, %p172
      %p174 = scmp.ne.s32.totalorder %s160, %s161
      %p175 = scmp.eq.s32.totalorder %s38, 1
      %p176 = por %p174, %p175
      %p178 = scmp.ne.s32.totalorder %s161, %s177
      %p179 = scmp.eq.s32.totalorder %s38, 0
      %p180 = por %p178, %p179
      %s181 = ssub.s32 %s32, %s39
      %p182 = scmp.eq.s32.totalorder %s181, 0
      %s184 = sadd.s32 %s183, 1
      %s185 = scalar_select %p182, %s183, %s184
      %p188 = pneg %p182
      %p189 = scmp.eq.s32.totalorder %s32, 1
      %p190 = por %p188, %p189
      %p191 = scmp.ne.s32.totalorder %s183, %s186
      %p192 = scmp.eq.s32.totalorder %s32, 0
      %p193 = por %p191, %p192
      %p194 = scmp.ne.s32.totalorder %s183, %s186
      %p195 = scmp.eq.s32.totalorder %s37, 1
      %p196 = por %p194, %p195
      %p197 = scmp.ne.s32.totalorder %s186, %s187
      %p198 = scmp.eq.s32.totalorder %s37, 0
      %p199 = por %p197, %p198
      %p200 = scmp.ne.s32.totalorder %s186, %s187
      %p201 = scmp.eq.s32.totalorder %s38, 1
      %p202 = por %p200, %p201
      %p204 = scmp.ne.s32.totalorder %s187, %s203
      %p205 = scmp.eq.s32.totalorder %s38, 0
      %p206 = por %p204, %p205
      %s207 = ssub.s32 %s32, %s39
      %p208 = scmp.eq.s32.totalorder %s207, 0
      %s210 = sadd.s32 %s209, 1
      %s211 = scalar_select %p208, %s209, %s210
      %p214 = pneg %p208
      %p215 = scmp.eq.s32.totalorder %s32, 1
      %p216 = por %p214, %p215
      %p217 = scmp.ne.s32.totalorder %s209, %s212
      %p218 = scmp.eq.s32.totalorder %s32, 0
      %p219 = por %p217, %p218
      %p220 = scmp.ne.s32.totalorder %s209, %s212
      %p221 = scmp.eq.s32.totalorder %s37, 1
      %p222 = por %p220, %p221
      %p223 = scmp.ne.s32.totalorder %s212, %s213
      %p224 = scmp.eq.s32.totalorder %s37, 0
      %p225 = por %p223, %p224
      %p226 = scmp.ne.s32.totalorder %s212, %s213
      %p227 = scmp.eq.s32.totalorder %s38, 1
      %p228 = por %p226, %p227
      %p230 = scmp.ne.s32.totalorder %s213, %s229
      %p231 = scmp.eq.s32.totalorder %s38, 0
      %p232 = por %p230, %p231
      %s233 = ssub.s32 %s32, %s39
      %p234 = scmp.eq.s32.totalorder %s233, 0
      %s236 = sadd.s32 %s235, 1
      %s237 = scalar_select %p234, %s235, %s236
      %p240 = pneg %p234
      %p241 = scmp.eq.s32.totalorder %s32, 1
      %p242 = por %p240, %p241
      %p243 = scmp.ne.s32.totalorder %s235, %s238
      %p244 = scmp.eq.s32.totalorder %s32, 0
      %p245 = por %p243, %p244
      %p246 = scmp.ne.s32.totalorder %s235, %s238
      %p247 = scmp.eq.s32.totalorder %s37, 1
      %p248 = por %p246, %p247
      %p249 = scmp.ne.s32.totalorder %s238, %s239
      %p250 = scmp.eq.s32.totalorder %s37, 0
      %p251 = por %p249, %p250
      %p252 = scmp.ne.s32.totalorder %s238, %s239
      %p253 = scmp.eq.s32.totalorder %s38, 1
      %p254 = por %p252, %p253
      %p256 = scmp.ne.s32.totalorder %s239, %s255
      %p257 = scmp.eq.s32.totalorder %s38, 0
      %p258 = por %p256, %p257
      %s259 = ssub.s32 %s32, %s39
      %p260 = scmp.eq.s32.totalorder %s259, 0
      %s262 = sadd.s32 %s261, 1
      %s263 = scalar_select %p260, %s261, %s262
      %p266 = pneg %p260
      %p267 = scmp.eq.s32.totalorder %s32, 1
      %p268 = por %p266, %p267
      %p269 = scmp.ne.s32.totalorder %s261, %s264
      %p270 = scmp.eq.s32.totalorder %s32, 0
      %p271 = por %p269, %p270
      %p272 = scmp.ne.s32.totalorder %s261, %s264
      %p273 = scmp.eq.s32.totalorder %s37, 1
      %p274 = por %p272, %p273
      %p275 = scmp.ne.s32.totalorder %s264, %s265
      %p276 = scmp.eq.s32.totalorder %s37, 0
      %p277 = por %p275, %p276
      %p278 = scmp.ne.s32.totalorder %s264, %s265
      %p279 = scmp.eq.s32.totalorder %s38, 1
      %p280 = por %p278, %p279
      %p282 = scmp.ne.s32.totalorder %s265, %s281
      %p283 = scmp.eq.s32.totalorder %s38, 0
      %p284 = por %p282, %p283
      %s285 = ssub.s32 %s32, %s39
      %p286 = scmp.eq.s32.totalorder %s285, 0
      %s288 = sadd.s32 %s287, 1
      %s289 = scalar_select %p286, %s287, %s288
      %p292 = pneg %p286
      %p293 = scmp.eq.s32.totalorder %s32, 1
      %p294 = por %p292, %p293
      %p295 = scmp.ne.s32.totalorder %s287, %s290
      %p296 = scmp.eq.s32.totalorder %s32, 0
      %p297 = por %p295, %p296
      %p298 = scmp.ne.s32.totalorder %s287, %s290
      %p299 = scmp.eq.s32.totalorder %s37, 1
      %p300 = por %p298, %p299
      %p301 = scmp.ne.s32.totalorder %s290, %s291
      %p302 = scmp.eq.s32.totalorder %s37, 0
      %p303 = por %p301, %p302
      %p304 = scmp.ne.s32.totalorder %s290, %s291
      %p305 = scmp.eq.s32.totalorder %s38, 1
      %p306 = por %p304, %p305
      %p308 = scmp.ne.s32.totalorder %s291, %s307
      %p309 = scmp.eq.s32.totalorder %s38, 0
      %p310 = por %p308, %p309
      %s311 = ssub.s32 %s32, %s39
      %p312 = scmp.eq.s32.totalorder %s311, 0
      %s314 = sadd.s32 %s313, 1
      %s315 = scalar_select %p312, %s313, %s314
      %p318 = pneg %p312
      %p319 = scmp.eq.s32.totalorder %s32, 1
      %p320 = por %p318, %p319
      %p321 = scmp.ne.s32.totalorder %s313, %s316
      %p322 = scmp.eq.s32.totalorder %s32, 0
      %p323 = por %p321, %p322
      %p324 = scmp.ne.s32.totalorder %s313, %s316
      %p325 = scmp.eq.s32.totalorder %s37, 1
      %p326 = por %p324, %p325
      %p327 = scmp.ne.s32.totalorder %s316, %s317
      %p328 = scmp.eq.s32.totalorder %s37, 0
      %p329 = por %p327, %p328
      %p330 = scmp.ne.s32.totalorder %s316, %s317
      %p331 = scmp.eq.s32.totalorder %s38, 1
      %p332 = por %p330, %p331
      %p334 = scmp.ne.s32.totalorder %s317, %s333
      %p335 = scmp.eq.s32.totalorder %s38, 0
      %p336 = por %p334, %p335
      %s338 = sadd.s32 %s337, 1
      %p341 = scmp.eq.s32.totalorder %s32, 1
      %p342 = scmp.ne.s32.totalorder %s337, %s339
      %p343 = scmp.eq.s32.totalorder %s32, 0
      %p344 = por %p342, %p343
      %p345 = scmp.ne.s32.totalorder %s337, %s339
      %p346 = scmp.eq.s32.totalorder %s37, 1
      %p347 = por %p345, %p346
      %p348 = scmp.ne.s32.totalorder %s339, %s340
      %p349 = scmp.eq.s32.totalorder %s37, 0
      %p350 = por %p348, %p349
      %p351 = scmp.ne.s32.totalorder %s339, %s340
      %p352 = scmp.eq.s32.totalorder %s38, 1
      %p353 = por %p351, %p352
      %p355 = scmp.ne.s32.totalorder %s340, %s354
      %p356 = scmp.eq.s32.totalorder %s38, 0
      %p357 = por %p355, %p356
      %s359 = sadd.s32 %s358, 1
      %p362 = scmp.eq.s32.totalorder %s32, 1
      %p363 = scmp.ne.s32.totalorder %s358, %s360
      %p364 = scmp.eq.s32.totalorder %s32, 0
      %p365 = por %p363, %p364
      %p366 = scmp.ne.s32.totalorder %s358, %s360
      %p367 = scmp.eq.s32.totalorder %s37, 1
      %p368 = por %p366, %p367
      %p369 = scmp.ne.s32.totalorder %s360, %s361
      %p370 = scmp.eq.s32.totalorder %s37, 0
      %p371 = por %p369, %p370
      %p372 = scmp.ne.s32.totalorder %s360, %s361
      %p373 = scmp.eq.s32.totalorder %s38, 1
      %p374 = por %p372, %p373
      %p376 = scmp.ne.s32.totalorder %s361, %s375
      %p377 = scmp.eq.s32.totalorder %s38, 0
      %p378 = por %p376, %p377
      %s380 = sadd.s32 %s379, 1
      %p383 = scmp.eq.s32.totalorder %s32, 1
      %p384 = scmp.ne.s32.totalorder %s379, %s381
      %p385 = scmp.eq.s32.totalorder %s32, 0
      %p386 = por %p384, %p385
      %p387 = scmp.ne.s32.totalorder %s379, %s381
      %p388 = scmp.eq.s32.totalorder %s37, 1
      %p389 = por %p387, %p388
      %p390 = scmp.ne.s32.totalorder %s381, %s382
      %p391 = scmp.eq.s32.totalorder %s37, 0
      %p392 = por %p390, %p391
      %p393 = scmp.ne.s32.totalorder %s381, %s382
      %p394 = scmp.eq.s32.totalorder %s38, 1
      %p395 = por %p393, %p394
      %p397 = scmp.ne.s32.totalorder %s382, %s396
      %p398 = scmp.eq.s32.totalorder %s38, 0
      %p399 = por %p397, %p398
      %s400 = ssub.s32 %s32, %s39
      %p401 = scmp.eq.s32.totalorder %s400, 0
      %s403 = sadd.s32 %s402, 1
      %s404 = scalar_select %p401, %s402, %s403
      %p407 = pneg %p401
      %p408 = scmp.eq.s32.totalorder %s32, 1
      %p409 = por %p407, %p408
      %p410 = scmp.ne.s32.totalorder %s402, %s405
      %p411 = scmp.eq.s32.totalorder %s32, 0
      %p412 = por %p410, %p411
      %p413 = scmp.ne.s32.totalorder %s402, %s405
      %p414 = scmp.eq.s32.totalorder %s37, 1
      %p415 = por %p413, %p414
      %p416 = scmp.ne.s32.totalorder %s405, %s406
      %p417 = scmp.eq.s32.totalorder %s37, 0
      %p418 = por %p416, %p417
      %p419 = scmp.ne.s32.totalorder %s405, %s406
      %p420 = scmp.eq.s32.totalorder %s38, 1
      %p421 = por %p419, %p420
      %p423 = scmp.ne.s32.totalorder %s406, %s422
      %p424 = scmp.eq.s32.totalorder %s38, 0
      %p425 = por %p423, %p424
      %s426 = ssub.s32 %s32, %s39
      %p427 = scmp.eq.s32.totalorder %s426, 0
      %s429 = sadd.s32 %s428, 1
      %s430 = scalar_select %p427, %s428, %s429
      %p433 = pneg %p427
      %p434 = scmp.eq.s32.totalorder %s32, 1
      %p435 = por %p433, %p434
      %p436 = scmp.ne.s32.totalorder %s428, %s431
      %p437 = scmp.eq.s32.totalorder %s32, 0
      %p438 = por %p436, %p437
      %p439 = scmp.ne.s32.totalorder %s428, %s431
      %p440 = scmp.eq.s32.totalorder %s37, 1
      %p441 = por %p439, %p440
      %p442 = scmp.ne.s32.totalorder %s431, %s432
      %p443 = scmp.eq.s32.totalorder %s37, 0
      %p444 = por %p442, %p443
      %p445 = scmp.ne.s32.totalorder %s431, %s432
      %p446 = scmp.eq.s32.totalorder %s38, 1
      %p447 = por %p445, %p446
      %p449 = scmp.ne.s32.totalorder %s432, %s448
      %p450 = scmp.eq.s32.totalorder %s38, 0
      %p451 = por %p449, %p450
      %p452 = scmp.le.s32.totalorder 1, %s32
      %p453 = scmp.lt.s32.totalorder %s32, 3
      %p454 = pnand %p452, %p453
      %p455 = pneg %p454
      // Predicated region
      $region9: #{transformer_forward.1} parent=5 // pred_check
        _
      $region10: #{transformer_forward.1} parent=5 // pred_check_branch
        %457 = sbr.rel (%p454) target = $region12
      $region11: #{transformer_forward.1} parent=5 // pred_region
        %s458 = ssub.s32 %s32, 1
        // Predicated region
        $region13: #{transformer_forward.1} parent=11 // pred_check
          %p459 = pneg %p53
        $region14: #{transformer_forward.1} parent=11 // pred_check_branch
          %461 = sbr.rel (%p459) target = $region16
        $region15: #{transformer_forward.1} parent=11 // pred_region
          _
        $region16: #{transformer_forward.1} parent=11 // pred_fallthru
          _
        // Predicated region
        $region17: #{transformer_forward.1} parent=11 // pred_check
          %p462 = pneg %p74
        $region18: #{transformer_forward.1} parent=11 // pred_check_branch
          %464 = sbr.rel (%p462) target = $region20
        $region19: #{transformer_forward.1} parent=11 // pred_region
          _
        $region20: #{transformer_forward.1} parent=11 // pred_fallthru
          _
        // Predicated region
        $region21: #{transformer_forward.1} parent=11 // pred_check
          %p465 = pneg %p95
        $region22: #{transformer_forward.1} parent=11 // pred_check_branch
          %467 = sbr.rel (%p465) target = $region24
        $region23: #{transformer_forward.1} parent=11 // pred_region
          _
        $region24: #{transformer_forward.1} parent=11 // pred_fallthru
          _
        // Predicated region
        $region25: #{transformer_forward.1} parent=11 // pred_check
          %p468 = pneg %p350
        $region26: #{transformer_forward.1} parent=11 // pred_check_branch
          %470 = sbr.rel (%p468) target = $region28
        $region27: #{transformer_forward.1} parent=11 // pred_region
          _
        $region28: #{transformer_forward.1} parent=11 // pred_fallthru
          _
        // Predicated region
        $region29: #{transformer_forward.1} parent=11 // pred_check
          %p471 = pneg %p371
        $region30: #{transformer_forward.1} parent=11 // pred_check_branch
          %473 = sbr.rel (%p471) target = $region32
        $region31: #{transformer_forward.1} parent=11 // pred_region
          %475 = vsyncadd [#allocation9], 0
          %s476 = sshll.u32 %s14, 4
          %s477 = int_to_ptr.hbm [resolvable:$true] %s476
          %s478 = sshll.u32 [#allocation10], 4
          %s479 = int_to_ptr.vmem [resolvable:$true] %s478
          %484 = dma.hbm_to_vmem [thread:$0]  %s477, 1024, %s479, [#allocation9], 128, 128, 8
        $region32: #{transformer_forward.1} parent=11 // pred_fallthru
          _
      $region12: #{transformer_forward.1} parent=5 // pred_fallthru
        _
      %p485 = scmp.lt.s32.totalorder %s32, 2
      // Predicated region
      $region33: #{transformer_forward.1} parent=5 // pred_check
        %p486 = pneg %p485
      $region34: #{transformer_forward.1} parent=5 // pred_check_branch
        %488 = sbr.rel (%p486) target = $region36
      $region35: #{transformer_forward.1} parent=5 // pred_region
        // Predicated region
        $region37: #{transformer_forward.1} parent=35 // pred_check
          %p489 = pneg %p115
        $region38: #{transformer_forward.1} parent=35 // pred_check_branch
          %491 = sbr.rel (%p489) target = $region40
        $region39: #{transformer_forward.1} parent=35 // pred_region
          %p492 = scmp.lt.s32.totalorder %s32, 1
          %s493 = scalar_select %p492, %s32, 1
          %s494 = smul.addr %s493, 8
          %s495 = smul.addr %s494, 8
          %s496 = scalar_lea.vmem %s4, %s495
        $region40: #{transformer_forward.1} parent=35 // pred_fallthru
          _
        // Predicated region
        $region41: #{transformer_forward.1} parent=35 // pred_check
          %p497 = pneg %p141
        $region42: #{transformer_forward.1} parent=35 // pred_check_branch
          %499 = sbr.rel (%p497) target = $region44
        $region43: #{transformer_forward.1} parent=35 // pred_region
          %p500 = scmp.lt.s32.totalorder %s32, 1
          %s501 = scalar_select %p500, %s32, 1
          %s502 = smul.addr %s501, 8
          %s503 = smul.addr %s502, 8
          %s504 = scalar_lea.vmem %s5, %s503
        $region44: #{transformer_forward.1} parent=35 // pred_fallthru
          _
        // Predicated region
        $region45: #{transformer_forward.1} parent=35 // pred_check
          %p505 = pneg %p167
        $region46: #{transformer_forward.1} parent=35 // pred_check_branch
          %507 = sbr.rel (%p505) target = $region48
        $region47: #{transformer_forward.1} parent=35 // pred_region
          %p508 = scmp.lt.s32.totalorder %s32, 1
          %s509 = scalar_select %p508, %s32, 1
          %s510 = scalar_lea.vmem %s6, %s509
        $region48: #{transformer_forward.1} parent=35 // pred_fallthru
          _
        // Predicated region
        $region49: #{transformer_forward.1} parent=35 // pred_check
          %p511 = pneg %p193
        $region50: #{transformer_forward.1} parent=35 // pred_check_branch
          %513 = sbr.rel (%p511) target = $region52
        $region51: #{transformer_forward.1} parent=35 // pred_region
          %s514 = sand.u32 %s183, 1
          %s515 = scalar_lea.sflag [#allocation6], %s514
          %s516 = sand.u32 %s183, 1
          %s517 = smul.addr %s516, 64
          %s518 = scalar_lea.vmem [#allocation5], %s517
          %520 = vsyncadd %s515, 0
          %s521 = smul.addr %s32, 8
          %s522 = smul.addr %s521, 8
          %s523 = scalar_lea.hbm %s7, %s522
          %s524 = sshll.u32 %s523, 4
          %s525 = int_to_ptr.hbm [resolvable:$true] %s524
          %s526 = sshll.u32 %s518, 4
          %s527 = int_to_ptr.vmem [resolvable:$true] %s526
          %532 = dma.hbm_to_vmem [thread:$0]  %s525, 1024, %s527, %s515, 128, 128, 8
        $region52: #{transformer_forward.1} parent=35 // pred_fallthru
          _
        // Predicated region
        $region53: #{transformer_forward.1} parent=35 // pred_check
          %p533 = pneg %p219
        $region54: #{transformer_forward.1} parent=35 // pred_check_branch
          %535 = sbr.rel (%p533) target = $region56
        $region55: #{transformer_forward.1} parent=35 // pred_region
          %s536 = sand.u32 %s32, 1
          %s537 = scalar_lea.sflag [#allocation9], %s536
          %s538 = sand.u32 %s209, 1
          %s539 = smul.addr %s538, 64
          %s540 = scalar_lea.vmem [#allocation8], %s539
          %542 = vsyncadd %s537, 0
          %s543 = smul.addr %s32, 8
          %s544 = smul.addr %s543, 8
          %s545 = scalar_lea.hbm %s8, %s544
          %s546 = sshll.u32 %s545, 4
          %s547 = int_to_ptr.hbm [resolvable:$true] %s546
          %s548 = sshll.u32 %s540, 4
          %s549 = int_to_ptr.vmem [resolvable:$true] %s548
          %554 = dma.hbm_to_vmem [thread:$0]  %s547, 1024, %s549, %s537, 128, 128, 8
        $region56: #{transformer_forward.1} parent=35 // pred_fallthru
          _
        // Predicated region
        $region57: #{transformer_forward.1} parent=35 // pred_check
          %p555 = pneg %p245
        $region58: #{transformer_forward.1} parent=35 // pred_check_branch
          %557 = sbr.rel (%p555) target = $region60
        $region59: #{transformer_forward.1} parent=35 // pred_region
          %p558 = scmp.lt.s32.totalorder %s32, 1
          %s559 = scalar_select %p558, %s32, 1
          %s560 = scalar_lea.vmem %s9, %s559
        $region60: #{transformer_forward.1} parent=35 // pred_fallthru
          _
        // Predicated region
        $region61: #{transformer_forward.1} parent=35 // pred_check
          %p561 = pneg %p271
        $region62: #{transformer_forward.1} parent=35 // pred_check_branch
          %563 = sbr.rel (%p561) target = $region64
        $region63: #{transformer_forward.1} parent=35 // pred_region
          %p564 = scmp.lt.s32.totalorder %s32, 1
          %s565 = scalar_select %p564, %s32, 1
          %s566 = smul.addr %s565, 16
          %s567 = smul.addr %s566, 8
          %s568 = scalar_lea.vmem %s10, %s567
        $region64: #{transformer_forward.1} parent=35 // pred_fallthru
          _
        // Predicated region
        $region65: #{transformer_forward.1} parent=35 // pred_check
          %p569 = pneg %p297
        $region66: #{transformer_forward.1} parent=35 // pred_check_branch
          %571 = sbr.rel (%p569) target = $region68
        $region67: #{transformer_forward.1} parent=35 // pred_region
          %p572 = scmp.lt.s32.totalorder %s32, 1
          %s573 = scalar_select %p572, %s32, 1
          %s574 = smul.addr %s573, 16
          %s575 = smul.addr %s574, 8
          %s576 = scalar_lea.vmem %s11, %s575
        $region68: #{transformer_forward.1} parent=35 // pred_fallthru
          _
        // Predicated region
        $region69: #{transformer_forward.1} parent=35 // pred_check
          %p577 = pneg %p323
        $region70: #{transformer_forward.1} parent=35 // pred_check_branch
          %579 = sbr.rel (%p577) target = $region72
        $region71: #{transformer_forward.1} parent=35 // pred_region
          %p580 = scmp.lt.s32.totalorder %s32, 1
          %s581 = scalar_select %p580, %s32, 1
          %s582 = smul.addr %s581, 32
          %s583 = smul.addr %s582, 8
          %s584 = scalar_lea.vmem %s12, %s583
        $region72: #{transformer_forward.1} parent=35 // pred_fallthru
          _
      $region36: #{transformer_forward.1} parent=5 // pred_fallthru
        _
      %p585 = scmp.le.s32.totalorder 1, %s32
      %p586 = scmp.lt.s32.totalorder %s32, 3
      %p587 = pnand %p585, %p586
      %p588 = pneg %p587
      // Predicated region
      $region73: #{transformer_forward.1} parent=5 // pred_check
        _
      $region74: #{transformer_forward.1} parent=5 // pred_check_branch
        %590 = sbr.rel (%p587) target = $region76
      $region75: #{transformer_forward.1} parent=5 // pred_region
        %s591 = ssub.s32 %s32, 1
        %s592 = sand.u32 %s186, 1
        %s593 = scalar_lea.sflag [#allocation6], %s592
        %s594 = sand.u32 %s186, 1
        %s595 = smul.addr %s594, 64
        %s596 = scalar_lea.vmem [#allocation5], %s595
        // Predicated region
        $region77: #{transformer_forward.1} parent=75 // pred_check
          %p597 = pneg %p199
        $region78: #{transformer_forward.1} parent=75 // pred_check_branch
          %599 = sbr.rel (%p597) target = $region80
        $region79: #{transformer_forward.1} parent=75 // pred_region
          %601 = dma.done %s593, 1024
        $region80: #{transformer_forward.1} parent=75 // pred_fallthru
          _
        %s602 = sand.u32 %s37, 1
        %s603 = scalar_lea.sflag [#allocation9], %s602
        %s604 = sand.u32 %s212, 1
        %s605 = smul.addr %s604, 64
        %s606 = scalar_lea.vmem [#allocation8], %s605
        // Predicated region
        $region81: #{transformer_forward.1} parent=75 // pred_check
          %p607 = pneg %p225
        $region82: #{transformer_forward.1} parent=75 // pred_check_branch
          %609 = sbr.rel (%p607) target = $region84
        $region83: #{transformer_forward.1} parent=75 // pred_region
          %611 = dma.done %s603, 1024
        $region84: #{transformer_forward.1} parent=75 // pred_fallthru
          _
        // Predicated region
        $region85: #{transformer_forward.1} parent=75 // pred_check
          %p612 = pneg %p371
        $region86: #{transformer_forward.1} parent=75 // pred_check_branch
          %614 = sbr.rel (%p612) target = $region88
        $region87: #{transformer_forward.1} parent=75 // pred_region
          %616 = dma.done [#allocation9], 1024
        $region88: #{transformer_forward.1} parent=75 // pred_fallthru
          _
        %p617 = pneg %p53
        %p618 = pneg %p50
        %p619 = pneg %p74
        %p620 = pneg %p71
        %p621 = pneg %p95
        %p622 = pneg %p92
        %p623 = scmp.lt.s32.totalorder %s37, 1
        %s624 = scalar_select %p623, %s37, 1
        %s625 = smul.addr %s624, 8
        %s626 = smul.addr %s625, 8
        %s627 = scalar_lea.vmem %s4, %s626
        %p628 = pneg %p121
        %p629 = pneg %p118
        %p630 = scmp.lt.s32.totalorder %s37, 1
        %s631 = scalar_select %p630, %s37, 1
        %s632 = smul.addr %s631, 8
        %s633 = smul.addr %s632, 8
        %s634 = scalar_lea.vmem %s5, %s633
        %p635 = pneg %p147
        %p636 = pneg %p144
        %p637 = scmp.lt.s32.totalorder %s37, 1
        %s638 = scalar_select %p637, %s37, 1
        %s639 = scalar_lea.vmem %s6, %s638
        %p640 = pneg %p173
        %p641 = pneg %p170
        %s642 = sand.u32 %s186, 1
        %s643 = scalar_lea.sflag [#allocation6], %s642
        %s644 = sand.u32 %s186, 1
        %s645 = smul.addr %s644, 64
        %s646 = scalar_lea.vmem [#allocation5], %s645
        %p647 = pneg %p199
        %p648 = pneg %p196
        %s649 = sand.u32 %s37, 1
        %s650 = scalar_lea.sflag [#allocation9], %s649
        %s651 = sand.u32 %s212, 1
        %s652 = smul.addr %s651, 64
        %s653 = scalar_lea.vmem [#allocation8], %s652
        %p654 = pneg %p225
        %p655 = pneg %p222
        %p656 = scmp.lt.s32.totalorder %s37, 1
        %s657 = scalar_select %p656, %s37, 1
        %s658 = scalar_lea.vmem %s9, %s657
        %p659 = pneg %p251
        %p660 = pneg %p248
        %p661 = scmp.lt.s32.totalorder %s37, 1
        %s662 = scalar_select %p661, %s37, 1
        %s663 = smul.addr %s662, 16
        %s664 = smul.addr %s663, 8
        %s665 = scalar_lea.vmem %s10, %s664
        %p666 = pneg %p277
        %p667 = pneg %p274
        %p668 = scmp.lt.s32.totalorder %s37, 1
        %s669 = scalar_select %p668, %s37, 1
        %s670 = smul.addr %s669, 16
        %s671 = smul.addr %s670, 8
        %s672 = scalar_lea.vmem %s11, %s671
        %p673 = pneg %p303
        %p674 = pneg %p300
        %p675 = scmp.lt.s32.totalorder %s37, 1
        %s676 = scalar_select %p675, %s37, 1
        %s677 = smul.addr %s676, 32
        %s678 = smul.addr %s677, 8
        %s679 = scalar_lea.vmem %s12, %s678
        %p680 = pneg %p329
        %p681 = pneg %p326
        %p682 = pneg %p350
        %p683 = pneg %p347
        %p684 = pneg %p371
        %p685 = pneg %p368
        %p686 = pneg %p392
        %p687 = pneg %p389
        %p688 = pneg %p418
        %p689 = pneg %p415
        %p690 = scmp.lt.s32.totalorder %s37, 1
        %s691 = scalar_select %p690, %s37, 1
        %s692 = smul.addr %s691, 4
        %s693 = scalar_lea.vmem %s16, %s692
        %p694 = pneg %p444
        %p695 = pneg %p441
        %p696 = scmp.lt.s32.totalorder %s37, 1
        %s697 = scalar_select %p696, %s37, 1
        %s698 = smul.addr %s697, 4
        %s699 = scalar_lea.vmem %s17, %s698
        %p700 = scmp.lt.s32.totalorder %s37, 1
        %s701 = scalar_select %p700, %s37, 1
        %s702 = smul.addr %s701, 8
        %s703 = smul.addr %s702, 8
        %s704 = scalar_lea.vmem %s4, %s703
        %p705 = scmp.lt.s32.totalorder %s37, 1
        %s706 = scalar_select %p705, %s37, 1
        %s707 = smul.addr %s706, 8
        %s708 = smul.addr %s707, 8
        %s709 = scalar_lea.vmem %s5, %s708
        %p710 = scmp.lt.s32.totalorder %s37, 1
        %s711 = scalar_select %p710, %s37, 1
        %s712 = scalar_lea.vmem %s6, %s711
        %p713 = scmp.lt.s32.totalorder %s37, 1
        %s714 = scalar_select %p713, %s37, 1
        %s715 = scalar_lea.vmem %s9, %s714
        %p716 = scmp.lt.s32.totalorder %s37, 1
        %s717 = scalar_select %p716, %s37, 1
        %s718 = smul.addr %s717, 16
        %s719 = smul.addr %s718, 8
        %s720 = scalar_lea.vmem %s10, %s719
        %p721 = scmp.lt.s32.totalorder %s37, 1
        %s722 = scalar_select %p721, %s37, 1
        %s723 = smul.addr %s722, 16
        %s724 = smul.addr %s723, 8
        %s725 = scalar_lea.vmem %s11, %s724
        %p726 = scmp.lt.s32.totalorder %s37, 1
        %s727 = scalar_select %p726, %s37, 1
        %s728 = smul.addr %s727, 32
        %s729 = smul.addr %s728, 8
        %s730 = scalar_lea.vmem %s12, %s729
        %p731 = scmp.lt.s32.totalorder %s37, 1
        %s732 = scalar_select %p731, %s37, 1
        %s733 = smul.addr %s732, 4
        %s734 = scalar_lea.vmem %s16, %s733
        %p735 = scmp.lt.s32.totalorder %s37, 1
        %s736 = scalar_select %p735, %s37, 1
        %s737 = smul.addr %s736, 4
        %s738 = scalar_lea.vmem %s17, %s737
        %s739 = sld [smem:[#allocation4]]
        %p740 = scmp.eq.s32.totalorder %s37, 0
        // Predicated region
        $region89: #{transformer_forward.1} parent=75 // pred_check
          %p741 = pneg %p740
        $region90: #{transformer_forward.1} parent=75 // pred_check_branch
          %743 = sbr.rel (%p741) target = $region92
        $region91: #{transformer_forward.1} parent=75 // pred_region
          %v744 = vld [vmem:[%s1] sm:$0x3]
          %vm745 = vcmask 517120
          %746 = vst.msk [vmem:[#allocation2] sm:$0x3] %vm745, %v744
        $region92: #{transformer_forward.1} parent=75 // pred_fallthru
          _
        %v747 = vld [vmem:[#allocation2] sm:$0x3]
        %v748 = vmul.f32 %v747, %v747
        %vm749 = vcmask 517120
        %v750 = vsel %vm749, %v748, 0.0
        %751 = vadd.xlane.f32.xlu0 %v750
        %v752 = vpop.xlane.xlu0 %751
        %v753 = vrcp.pop 64.0
        %v754 = vmul.f32 64.0, %v753
        %v755 = vsub.f32 1.0, %v754
        %v756 = vmul.f32 %v753, %v755
        %v757 = vadd.f32 %v753, %v756
        %vm758 = vweird.f32 %v753
        %v759 = vsel %vm758, %v753, %v757
        %v760 = vmul.f32 %v752, %v759
        %v761 = vld [vmem:[%s712] sm:$0x1]
        %v762 = vadd.f32 %v760, 1e-05
        %v763 = vrsqrt.pop %v762
        %v764 = vmul.f32 %v763, %v762
        %v765 = vmul.f32 %v764, %v763
        %v766 = vmul.f32 0.5, %v765
        %v767 = vsub.f32 1.5, %v766
        %v768 = vmul.f32 %v763, %v767
        %vm769 = vweird.f32 %v762
        %vm770 = vweird.f32 %v763
        %vm771 = vmor %vm769, %vm770
        %v772 = vsel %vm771, %v763, %v768
        %v773 = vmul.f32 %v747, %v772
        %v775 = vperm.slane %v761, 0
        %v777 = vmul.f32 %v775, %v773
        %v778 = vld [vmem:[%s596] sm:$0xff]
        %v779 = vld [vmem:[%s596 + $0x8] sm:$0xff]
        %v780 = vld [vmem:[%s596 + $0x10] sm:$0xff]
        %v781 = vld [vmem:[%s596 + $0x18] sm:$0xff]
        %v782 = vld [vmem:[%s596 + $0x20] sm:$0xff]
        %v783 = vld [vmem:[%s596 + $0x28] sm:$0xff]
        %v784 = vld [vmem:[%s596 + $0x30] sm:$0xff]
        %v785 = vld [vmem:[%s596 + $0x38] sm:$0xff]
        %vm786 = vcmask 523264
        %v788 = vsel %vm786, %v777, 0
        %790 = vmatpush.msra.mxu0 0.0
        %791 = vmatpush.msra.mxu0 0.0
        %792 = vmatpush.msra.mxu0 0.0
        %793 = vmatpush.msra.mxu0 0.0
        %794 = vmatpush.msra.mxu0 0.0
        %795 = vmatpush.msra.mxu0 0.0
        %796 = vmatpush.msra.mxu0 0.0
        %797 = vmatpush.msra.mxu0 0.0
        %798 = vmatpush.msra.mxu0 %v785
        %799 = vmatpush.msra.mxu0 %v784
        %800 = vmatpush.msra.mxu0 %v783
        %801 = vmatpush.msra.mxu0 %v782
        %802 = vmatpush.msra.mxu0 %v781
        %803 = vmatpush.msra.mxu0 %v780
        %804 = vmatpush.msra.mxu0 %v779
        %805 = vmatpush.msra.mxu0 %v778
        %806 = vmatmul.f32.gmra.mxu0 %v788
        %v807 = vpop.f32.mrf.mxu0
        %v808 = vadd.f32 0.0, %v807
        %809 = vdwg.mxu0
        %v810 = vld [vmem:[%s2] sm:$0x1]
        %v811 = vld [vmem:[%s3] sm:$0x1]
        %v813 = vperm.slane %v810, 0
        %815 = vrot.lane.b32.xlu0 %v813, 64
        %v816 = vpop.permute.xlu0 %815
        %v818 = vmul.f32 %v808, %v816
        %v820 = vperm.slane %v811, 0
        %822 = vrot.lane.b32.xlu0 %v820, 72
        %v823 = vpop.permute.xlu0 %822
        %v825 = vmul.f32 %v808, %v823
        %827 = vrot.lane.b32.xlu0 %v825, 120
        %v828 = vpop.permute.xlu0 %827
        %v830 = vsub.f32 %v818, %v828
        %831 = vrot.lane.b32.xlu0 %v820, 64
        %v832 = vpop.permute.xlu0 %831
        %v834 = vmul.f32 %v808, %v832
        %835 = vrot.lane.b32.xlu0 %v813, 72
        %v836 = vpop.permute.xlu0 %835
        %v838 = vmul.f32 %v808, %v836
        %840 = vrot.lane.b32.xlu0 %v838, 120
        %v841 = vpop.permute.xlu0 %840
        %v843 = vadd.f32 %v834, %v841
        %845 = vrot.lane.b32.xlu0 %v830, 64
        %v846 = vpop.permute.xlu0 %845
        %849 = vrot.lane.b32.xlu0 %v843, 72
        %v850 = vpop.permute.xlu0 %849
        %vm852 = vcmask 64512
        %v853 = vsel %vm852, %v846, %v850
        %854 = vrot.lane.b32.xlu0 %v813, 80
        %v855 = vpop.permute.xlu0 %854
        %v857 = vmul.f32 %v808, %v855
        %858 = vrot.lane.b32.xlu0 %v820, 88
        %v859 = vpop.permute.xlu0 %858
        %v861 = vmul.f32 %v808, %v859
        %863 = vrot.lane.b32.xlu0 %v861, 120
        %v864 = vpop.permute.xlu0 %863
        %v866 = vsub.f32 %v857, %v864
        %867 = vrot.lane.b32.xlu0 %v820, 80
        %v868 = vpop.permute.xlu0 %867
        %v870 = vmul.f32 %v808, %v868
        %871 = vrot.lane.b32.xlu0 %v813, 88
        %v872 = vpop.permute.xlu0 %871
        %v874 = vmul.f32 %v808, %v872
        %876 = vrot.lane.b32.xlu0 %v874, 120
        %v877 = vpop.permute.xlu0 %876
        %v879 = vadd.f32 %v870, %v877
        %881 = vrot.lane.b32.xlu0 %v866, 48
        %v882 = vpop.permute.xlu0 %881
        %885 = vrot.lane.b32.xlu0 %v879, 56
        %v886 = vpop.permute.xlu0 %885
        %v888 = vsel %vm852, %v882, %v886
        %v890 = vrot.slane %v888, 6
        %vm892 = vcmask 1041408
        %v893 = vsel %vm892, %v853, %v890
        %vm894 = vcmask 125952
        %895 = vst.msk [vmem:[%s734] sm:$0xf] %vm894, %v893
        %v897 = vrot.slane %v808, 6
        %898 = vrot.lane.b32.xlu0 %v897, 112
        %v899 = vpop.permute.xlu0 %898
        %v901 = vsel %vm892, %v808, %v899
        %903 = vrot.lane.b32.xlu0 %v901, 32
        %v904 = vpop.permute.xlu0 %903
        %906 = vst.msk [vmem:[%s738] sm:$0xf] %vm894, %v904
        %v907 = vld [vmem:[%s704] sm:$0xff]
        %v908 = vld [vmem:[%s704 + $0x8] sm:$0xff]
        %v909 = vld [vmem:[%s704 + $0x10] sm:$0xff]
        %v910 = vld [vmem:[%s704 + $0x18] sm:$0xff]
        %v911 = vld [vmem:[%s704 + $0x20] sm:$0xff]
        %v912 = vld [vmem:[%s704 + $0x28] sm:$0xff]
        %v913 = vld [vmem:[%s704 + $0x30] sm:$0xff]
        %v914 = vld [vmem:[%s704 + $0x38] sm:$0xff]
        %v915 = vld [vmem:[%s709] sm:$0xff]
        %v916 = vld [vmem:[%s709 + $0x8] sm:$0xff]
        %v917 = vld [vmem:[%s709 + $0x10] sm:$0xff]
        %v918 = vld [vmem:[%s709 + $0x18] sm:$0xff]
        %v919 = vld [vmem:[%s709 + $0x20] sm:$0xff]
        %v920 = vld [vmem:[%s709 + $0x28] sm:$0xff]
        %v921 = vld [vmem:[%s709 + $0x30] sm:$0xff]
        %v922 = vld [vmem:[%s709 + $0x38] sm:$0xff]
        %v923 = vlaneseq
        %v924 = vand.u32 %v923, 127
        %v925 = vstv %s739
        %vm926 = vcmp.lt.s32.totalorder %v924, %v925
        %v927 = vmul.f32 %v808, %v813
        %928 = vrot.lane.b32.xlu0 %v820, 8
        %v929 = vpop.permute.xlu0 %928
        %v931 = vmul.f32 %v808, %v929
        %933 = vrot.lane.b32.xlu0 %v931, 120
        %v934 = vpop.permute.xlu0 %933
        %v936 = vsub.f32 %v927, %v934
        %v937 = vmul.f32 %v808, %v820
        %938 = vrot.lane.b32.xlu0 %v813, 8
        %v939 = vpop.permute.xlu0 %938
        %v941 = vmul.f32 %v808, %v939
        %943 = vrot.lane.b32.xlu0 %v941, 120
        %v944 = vpop.permute.xlu0 %943
        %v946 = vadd.f32 %v937, %v944
        %948 = vrot.lane.b32.xlu0 %v946, 8
        %v949 = vpop.permute.xlu0 %948
        %v951 = vsel %vm852, %v936, %v949
        %v953 = vrot.slane %v951, 1
        %vm955 = vcmask 130048
        %v956 = vsel %vm955, %v951, 0
        %v959 = vsel %vm955, %v907, 0
        %v962 = vsel %vm955, %v908, 0
        %964 = vmatpush.xpose.msra.mxu0 0.0
        %965 = vmatpush.xpose.msra.mxu0 0.0
        %966 = vmatpush.xpose.msra.mxu0 0.0
        %967 = vmatpush.xpose.msra.mxu0 0.0
        %968 = vmatpush.xpose.msra.mxu0 0.0
        %969 = vmatpush.xpose.msra.mxu0 0.0
        %970 = vmatpush.xpose.msra.mxu0 0.0
        %971 = vmatpush.xpose.msra.mxu0 0.0
        %972 = vmatpush.xpose.msra.mxu0 0.0
        %973 = vmatpush.xpose.msra.mxu0 0.0
        %974 = vmatpush.xpose.msra.mxu0 0.0
        %975 = vmatpush.xpose.msra.mxu0 0.0
        %976 = vmatpush.xpose.msra.mxu0 0.0
        %977 = vmatpush.xpose.msra.mxu0 0.0
        %978 = vmatpush.xpose.msra.mxu0 %v962
        %979 = vmatpush.xpose.msra.mxu0 %v959
        %980 = vmatmul.f32.gmra.mxu0 %v956
        %v981 = vpop.f32.mrf.mxu0
        %v982 = vadd.f32 0.0, %v981
        %983 = vdwg.mxu0
        %v984 = vsel %vm955, %v953, 0
        %v987 = vsel %vm955, %v909, 0
        %v990 = vsel %vm955, %v910, 0
        %992 = vmatpush.xpose.msra.mxu0 0.0
        %993 = vmatpush.xpose.msra.mxu0 0.0
        %994 = vmatpush.xpose.msra.mxu0 0.0
        %995 = vmatpush.xpose.msra.mxu0 0.0
        %996 = vmatpush.xpose.msra.mxu0 0.0
        %997 = vmatpush.xpose.msra.mxu0 0.0
        %998 = vmatpush.xpose.msra.mxu0 0.0
        %999 = vmatpush.xpose.msra.mxu0 0.0
        %1000 = vmatpush.xpose.msra.mxu0 0.0
        %1001 = vmatpush.xpose.msra.mxu0 0.0
        %1002 = vmatpush.xpose.msra.mxu0 0.0
        %1003 = vmatpush.xpose.msra.mxu0 0.0
        %1004 = vmatpush.xpose.msra.mxu0 0.0
        %1005 = vmatpush.xpose.msra.mxu0 0.0
        %1006 = vmatpush.xpose.msra.mxu0 %v990
        %1007 = vmatpush.xpose.msra.mxu0 %v987
        %1008 = vmatmul.f32.gmra.mxu0 %v984
        %v1009 = vpop.f32.mrf.mxu0
        %v1010 = vadd.f32 0.0, %v1009
        %1011 = vdwg.mxu0
        %v1012 = vmul.f32 %v982, 0.25
        %v1013 = vmul.f32 %v1010, 0.25
        %v1014 = vsel %vm926, %v1012, -1e+30
        %v1015 = vsel %vm926, %v1013, -1e+30
        %v1017 = vrot.slane %v853, 1
        %v1019 = vmul.f32 %v951, %v853
        %v1020 = vmul.f32 %v953, %v1017
        %vm1021 = vcmask 122880
        %v1022 = vsel %vm1021, %v1019, 0.0
        %1023 = vadd.xlane.f32.xlu0 %v1022
        %v1024 = vpop.xlane.xlu0 %1023
        %v1025 = vsel %vm1021, %v1020, 0.0
        %1026 = vadd.xlane.f32.xlu0 %v1025
        %v1027 = vpop.xlane.xlu0 %1026
        %v1028 = vmul.f32 %v1024, 0.25
        %v1029 = vmul.f32 %v1027, 0.25
        %v1030 = vsel %vm1021, %v1014, -inf
        %1031 = vmax.xlane.f32.xlu0 %v1030
        %v1032 = vpop.xlane.xlu0 %1031
        %v1033 = vsel %vm1021, %v1015, -inf
        %1034 = vmax.xlane.f32.xlu0 %v1033
        %v1035 = vpop.xlane.xlu0 %1034
        %v1036 = vmax.f32 %v1032, %v1028
        %v1037 = vmax.f32 %v1035, %v1029
        %v1038 = vsub.f32 %v1014, %v1036
        %v1039 = vsub.f32 %v1015, %v1037
        %v1040 = vmul.f32 %v1038, 1.442695
        %v1041 = vpow.pop %v1040
        %v1042 = vmul.f32 %v1039, 1.442695
        %v1043 = vpow.pop %v1042
        %v1044 = vsub.f32 %v1028, %v1036
        %v1045 = vsub.f32 %v1029, %v1037
        %v1046 = vmul.f32 %v1044, 1.442695
        %v1047 = vpow.pop %v1046
        %v1048 = vmul.f32 %v1045, 1.442695
        %v1049 = vpow.pop %v1048
        %v1050 = vsel %vm1021, %v1041, 0.0
        %1051 = vadd.xlane.f32.xlu0 %v1050
        %v1052 = vpop.xlane.xlu0 %1051
        %v1053 = vsel %vm1021, %v1043, 0.0
        %1054 = vadd.xlane.f32.xlu0 %v1053
        %v1055 = vpop.xlane.xlu0 %1054
        %v1056 = vadd.f32 %v1052, %v1047
        %v1057 = vadd.f32 %v1055, %v1049
        %v1058 = vrcp.pop %v1056
        %v1059 = vrcp.pop %v1057
        %v1061 = vsel %vm955, %v1041, 0
        %1063 = vmatpush.msra.mxu0 0.0
        %1064 = vmatpush.msra.mxu0 0.0
        %1065 = vmatpush.msra.mxu0 0.0
        %1066 = vmatpush.msra.mxu0 0.0
        %1067 = vmatpush.msra.mxu0 0.0
        %1068 = vmatpush.msra.mxu0 0.0
        %1069 = vmatpush.msra.mxu0 0.0
        %1070 = vmatpush.msra.mxu0 0.0
        %1071 = vmatpush.msra.mxu0 0.0
        %1072 = vmatpush.msra.mxu0 0.0
        %1073 = vmatpush.msra.mxu0 0.0
        %1074 = vmatpush.msra.mxu0 0.0
        %1075 = vmatpush.msra.mxu0 0.0
        %1076 = vmatpush.msra.mxu0 0.0
        %1077 = vmatpush.msra.mxu0 %v916
        %1078 = vmatpush.msra.mxu0 %v915
        %1079 = vmatmul.f32.gmra.mxu0 %v1061
        %v1080 = vpop.f32.mrf.mxu0
        %v1081 = vadd.f32 0.0, %v1080
        %1082 = vdwg.mxu0
        %v1084 = vsel %vm955, %v1043, 0
        %1086 = vmatpush.msra.mxu0 0.0
        %1087 = vmatpush.msra.mxu0 0.0
        %1088 = vmatpush.msra.mxu0 0.0
        %1089 = vmatpush.msra.mxu0 0.0
        %1090 = vmatpush.msra.mxu0 0.0
        %1091 = vmatpush.msra.mxu0 0.0
        %1092 = vmatpush.msra.mxu0 0.0
        %1093 = vmatpush.msra.mxu0 0.0
        %1094 = vmatpush.msra.mxu0 0.0
        %1095 = vmatpush.msra.mxu0 0.0
        %1096 = vmatpush.msra.mxu0 0.0
        %1097 = vmatpush.msra.mxu0 0.0
        %1098 = vmatpush.msra.mxu0 0.0
        %1099 = vmatpush.msra.mxu0 0.0
        %1100 = vmatpush.msra.mxu0 %v918
        %1101 = vmatpush.msra.mxu0 %v917
        %1102 = vmatmul.f32.gmra.mxu0 %v1084
        %v1103 = vpop.f32.mrf.mxu0
        %v1104 = vadd.f32 0.0, %v1103
        %1105 = vdwg.mxu0
        %v1106 = vmul.f32 %v1081, %v1058
        %v1107 = vmul.f32 %v1104, %v1059
        %v1108 = vmul.f32 %v1047, %v1058
        %v1109 = vmul.f32 %v1049, %v1059
        %v1110 = vrot.slane %v808, 1
        %v1111 = vperm.slane %v808, 0
        %v1112 = vperm.slane %v1110, 0
        %1113 = vrot.lane.b32.xlu0 %v1111, 32
        %v1114 = vpop.permute.xlu0 %1113
        %1115 = vrot.lane.b32.xlu0 %v1112, 32
        %v1116 = vpop.permute.xlu0 %1115
        %v1119 = vmul.f32 %v1108, %v1114
        %v1120 = vmul.f32 %v1109, %v1116
        %v1121 = vadd.f32 %v1106, %v1119
        %v1122 = vadd.f32 %v1107, %v1120
        %1123 = vrot.lane.b32.xlu0 %v813, 16
        %v1124 = vpop.permute.xlu0 %1123
        %v1126 = vmul.f32 %v808, %v1124
        %1127 = vrot.lane.b32.xlu0 %v820, 24
        %v1128 = vpop.permute.xlu0 %1127
        %v1130 = vmul.f32 %v808, %v1128
        %1132 = vrot.lane.b32.xlu0 %v1130, 120
        %v1133 = vpop.permute.xlu0 %1132
        %v1135 = vsub.f32 %v1126, %v1133
        %1136 = vrot.lane.b32.xlu0 %v820, 16
        %v1137 = vpop.permute.xlu0 %1136
        %v1139 = vmul.f32 %v808, %v1137
        %1140 = vrot.lane.b32.xlu0 %v813, 24
        %v1141 = vpop.permute.xlu0 %1140
        %v1143 = vmul.f32 %v808, %v1141
        %1145 = vrot.lane.b32.xlu0 %v1143, 120
        %v1146 = vpop.permute.xlu0 %1145
        %v1148 = vadd.f32 %v1139, %v1146
        %1150 = vrot.lane.b32.xlu0 %v1135, 112
        %v1151 = vpop.permute.xlu0 %1150
        %1154 = vrot.lane.b32.xlu0 %v1148, 120
        %v1155 = vpop.permute.xlu0 %1154
        %v1157 = vsel %vm852, %v1151, %v1155
        %v1159 = vrot.slane %v1157, 1
        %v1161 = vsel %vm955, %v1157, 0
        %1163 = vmatpush.xpose.msra.mxu0 0.0
        %1164 = vmatpush.xpose.msra.mxu0 0.0
        %1165 = vmatpush.xpose.msra.mxu0 0.0
        %1166 = vmatpush.xpose.msra.mxu0 0.0
        %1167 = vmatpush.xpose.msra.mxu0 0.0
        %1168 = vmatpush.xpose.msra.mxu0 0.0
        %1169 = vmatpush.xpose.msra.mxu0 0.0
        %1170 = vmatpush.xpose.msra.mxu0 0.0
        %1171 = vmatpush.xpose.msra.mxu0 0.0
        %1172 = vmatpush.xpose.msra.mxu0 0.0
        %1173 = vmatpush.xpose.msra.mxu0 0.0
        %1174 = vmatpush.xpose.msra.mxu0 0.0
        %1175 = vmatpush.xpose.msra.mxu0 0.0
        %1176 = vmatpush.xpose.msra.mxu0 0.0
        %1177 = vmatpush.xpose.msra.mxu0 %v962
        %1178 = vmatpush.xpose.msra.mxu0 %v959
        %1179 = vmatmul.f32.gmra.mxu0 %v1161
        %v1180 = vpop.f32.mrf.mxu0
        %v1181 = vadd.f32 0.0, %v1180
        %1182 = vdwg.mxu0
        %v1183 = vsel %vm955, %v1159, 0
        %1185 = vmatpush.xpose.msra.mxu0 0.0
        %1186 = vmatpush.xpose.msra.mxu0 0.0
        %1187 = vmatpush.xpose.msra.mxu0 0.0
        %1188 = vmatpush.xpose.msra.mxu0 0.0
        %1189 = vmatpush.xpose.msra.mxu0 0.0
        %1190 = vmatpush.xpose.msra.mxu0 0.0
        %1191 = vmatpush.xpose.msra.mxu0 0.0
        %1192 = vmatpush.xpose.msra.mxu0 0.0
        %1193 = vmatpush.xpose.msra.mxu0 0.0
        %1194 = vmatpush.xpose.msra.mxu0 0.0
        %1195 = vmatpush.xpose.msra.mxu0 0.0
        %1196 = vmatpush.xpose.msra.mxu0 0.0
        %1197 = vmatpush.xpose.msra.mxu0 0.0
        %1198 = vmatpush.xpose.msra.mxu0 0.0
        %1199 = vmatpush.xpose.msra.mxu0 %v990
        %1200 = vmatpush.xpose.msra.mxu0 %v987
        %1201 = vmatmul.f32.gmra.mxu0 %v1183
        %v1202 = vpop.f32.mrf.mxu0
        %v1203 = vadd.f32 0.0, %v1202
        %1204 = vdwg.mxu0
        %v1205 = vmul.f32 %v1181, 0.25
        %v1206 = vmul.f32 %v1203, 0.25
        %v1207 = vsel %vm926, %v1205, -1e+30
        %v1208 = vsel %vm926, %v1206, -1e+30
        %v1209 = vmul.f32 %v1157, %v853
        %v1210 = vmul.f32 %v1159, %v1017
        %v1211 = vsel %vm1021, %v1209, 0.0
        %1212 = vadd.xlane.f32.xlu0 %v1211
        %v1213 = vpop.xlane.xlu0 %1212
        %v1214 = vsel %vm1021, %v1210, 0.0
        %1215 = vadd.xlane.f32.xlu0 %v1214
        %v1216 = vpop.xlane.xlu0 %1215
        %v1217 = vmul.f32 %v1213, 0.25
        %v1218 = vmul.f32 %v1216, 0.25
        %v1219 = vsel %vm1021, %v1207, -inf
        %1220 = vmax.xlane.f32.xlu0 %v1219
        %v1221 = vpop.xlane.xlu0 %1220
        %v1222 = vsel %vm1021, %v1208, -inf
        %1223 = vmax.xlane.f32.xlu0 %v1222
        %v1224 = vpop.xlane.xlu0 %1223
        %v1225 = vmax.f32 %v1221, %v1217
        %v1226 = vmax.f32 %v1224, %v1218
        %v1227 = vsub.f32 %v1207, %v1225
        %v1228 = vsub.f32 %v1208, %v1226
        %v1229 = vmul.f32 %v1227, 1.442695
        %v1230 = vpow.pop %v1229
        %v1231 = vmul.f32 %v1228, 1.442695
        %v1232 = vpow.pop %v1231
        %v1233 = vsub.f32 %v1217, %v1225
        %v1234 = vsub.f32 %v1218, %v1226
        %v1235 = vmul.f32 %v1233, 1.442695
        %v1236 = vpow.pop %v1235
        %v1237 = vmul.f32 %v1234, 1.442695
        %v1238 = vpow.pop %v1237
        %v1239 = vsel %vm1021, %v1230, 0.0
        %1240 = vadd.xlane.f32.xlu0 %v1239
        %v1241 = vpop.xlane.xlu0 %1240
        %v1242 = vsel %vm1021, %v1232, 0.0
        %1243 = vadd.xlane.f32.xlu0 %v1242
        %v1244 = vpop.xlane.xlu0 %1243
        %v1245 = vadd.f32 %v1241, %v1236
        %v1246 = vadd.f32 %v1244, %v1238
        %v1247 = vrcp.pop %v1245
        %v1248 = vrcp.pop %v1246
        %v1250 = vsel %vm955, %v1230, 0
        %1252 = vmatpush.msra.mxu0 0.0
        %1253 = vmatpush.msra.mxu0 0.0
        %1254 = vmatpush.msra.mxu0 0.0
        %1255 = vmatpush.msra.mxu0 0.0
        %1256 = vmatpush.msra.mxu0 0.0
        %1257 = vmatpush.msra.mxu0 0.0
        %1258 = vmatpush.msra.mxu0 0.0
        %1259 = vmatpush.msra.mxu0 0.0
        %1260 = vmatpush.msra.mxu0 0.0
        %1261 = vmatpush.msra.mxu0 0.0
        %1262 = vmatpush.msra.mxu0 0.0
        %1263 = vmatpush.msra.mxu0 0.0
        %1264 = vmatpush.msra.mxu0 0.0
        %1265 = vmatpush.msra.mxu0 0.0
        %1266 = vmatpush.msra.mxu0 %v916
        %1267 = vmatpush.msra.mxu0 %v915
        %1268 = vmatmul.f32.gmra.mxu0 %v1250
        %v1269 = vpop.f32.mrf.mxu0
        %v1270 = vadd.f32 0.0, %v1269
        %1271 = vdwg.mxu0
        %v1273 = vsel %vm955, %v1232, 0
        %1275 = vmatpush.msra.mxu0 0.0
        %1276 = vmatpush.msra.mxu0 0.0
        %1277 = vmatpush.msra.mxu0 0.0
        %1278 = vmatpush.msra.mxu0 0.0
        %1279 = vmatpush.msra.mxu0 0.0
        %1280 = vmatpush.msra.mxu0 0.0
        %1281 = vmatpush.msra.mxu0 0.0
        %1282 = vmatpush.msra.mxu0 0.0
        %1283 = vmatpush.msra.mxu0 0.0
        %1284 = vmatpush.msra.mxu0 0.0
        %1285 = vmatpush.msra.mxu0 0.0
        %1286 = vmatpush.msra.mxu0 0.0
        %1287 = vmatpush.msra.mxu0 0.0
        %1288 = vmatpush.msra.mxu0 0.0
        %1289 = vmatpush.msra.mxu0 %v918
        %1290 = vmatpush.msra.mxu0 %v917
        %1291 = vmatmul.f32.gmra.mxu0 %v1273
        %v1292 = vpop.f32.mrf.mxu0
        %v1293 = vadd.f32 0.0, %v1292
        %1294 = vdwg.mxu0
        %v1295 = vmul.f32 %v1270, %v1247
        %v1296 = vmul.f32 %v1293, %v1248
        %v1297 = vmul.f32 %v1236, %v1247
        %v1298 = vmul.f32 %v1238, %v1248
        %v1299 = vmul.f32 %v1297, %v1114
        %v1300 = vmul.f32 %v1298, %v1116
        %v1301 = vadd.f32 %v1295, %v1299
        %v1302 = vadd.f32 %v1296, %v1300
        %1303 = vrot.lane.b32.xlu0 %v813, 32
        %v1304 = vpop.permute.xlu0 %1303
        %v1306 = vmul.f32 %v808, %v1304
        %1307 = vrot.lane.b32.xlu0 %v820, 40
        %v1308 = vpop.permute.xlu0 %1307
        %v1310 = vmul.f32 %v808, %v1308
        %1312 = vrot.lane.b32.xlu0 %v1310, 120
        %v1313 = vpop.permute.xlu0 %1312
        %v1315 = vsub.f32 %v1306, %v1313
        %1316 = vrot.lane.b32.xlu0 %v820, 32
        %v1317 = vpop.permute.xlu0 %1316
        %v1319 = vmul.f32 %v808, %v1317
        %1320 = vrot.lane.b32.xlu0 %v813, 40
        %v1321 = vpop.permute.xlu0 %1320
        %v1323 = vmul.f32 %v808, %v1321
        %1325 = vrot.lane.b32.xlu0 %v1323, 120
        %v1326 = vpop.permute.xlu0 %1325
        %v1328 = vadd.f32 %v1319, %v1326
        %1330 = vrot.lane.b32.xlu0 %v1315, 96
        %v1331 = vpop.permute.xlu0 %1330
        %1334 = vrot.lane.b32.xlu0 %v1328, 104
        %v1335 = vpop.permute.xlu0 %1334
        %v1337 = vsel %vm852, %v1331, %v1335
        %v1339 = vrot.slane %v1337, 1
        %v1341 = vsel %vm955, %v1337, 0
        %v1344 = vsel %vm955, %v911, 0
        %v1347 = vsel %vm955, %v912, 0
        %1349 = vmatpush.xpose.msra.mxu0 0.0
        %1350 = vmatpush.xpose.msra.mxu0 0.0
        %1351 = vmatpush.xpose.msra.mxu0 0.0
        %1352 = vmatpush.xpose.msra.mxu0 0.0
        %1353 = vmatpush.xpose.msra.mxu0 0.0
        %1354 = vmatpush.xpose.msra.mxu0 0.0
        %1355 = vmatpush.xpose.msra.mxu0 0.0
        %1356 = vmatpush.xpose.msra.mxu0 0.0
        %1357 = vmatpush.xpose.msra.mxu0 0.0
        %1358 = vmatpush.xpose.msra.mxu0 0.0
        %1359 = vmatpush.xpose.msra.mxu0 0.0
        %1360 = vmatpush.xpose.msra.mxu0 0.0
        %1361 = vmatpush.xpose.msra.mxu0 0.0
        %1362 = vmatpush.xpose.msra.mxu0 0.0
        %1363 = vmatpush.xpose.msra.mxu0 %v1347
        %1364 = vmatpush.xpose.msra.mxu0 %v1344
        %1365 = vmatmul.f32.gmra.mxu0 %v1341
        %v1366 = vpop.f32.mrf.mxu0
        %v1367 = vadd.f32 0.0, %v1366
        %1368 = vdwg.mxu0
        %v1369 = vsel %vm955, %v1339, 0
        %v1372 = vsel %vm955, %v913, 0
        %v1375 = vsel %vm955, %v914, 0
        %1377 = vmatpush.xpose.msra.mxu0 0.0
        %1378 = vmatpush.xpose.msra.mxu0 0.0
        %1379 = vmatpush.xpose.msra.mxu0 0.0
        %1380 = vmatpush.xpose.msra.mxu0 0.0
        %1381 = vmatpush.xpose.msra.mxu0 0.0
        %1382 = vmatpush.xpose.msra.mxu0 0.0
        %1383 = vmatpush.xpose.msra.mxu0 0.0
        %1384 = vmatpush.xpose.msra.mxu0 0.0
        %1385 = vmatpush.xpose.msra.mxu0 0.0
        %1386 = vmatpush.xpose.msra.mxu0 0.0
        %1387 = vmatpush.xpose.msra.mxu0 0.0
        %1388 = vmatpush.xpose.msra.mxu0 0.0
        %1389 = vmatpush.xpose.msra.mxu0 0.0
        %1390 = vmatpush.xpose.msra.mxu0 0.0
        %1391 = vmatpush.xpose.msra.mxu0 %v1375
        %1392 = vmatpush.xpose.msra.mxu0 %v1372
        %1393 = vmatmul.f32.gmra.mxu0 %v1369
        %v1394 = vpop.f32.mrf.mxu0
        %v1395 = vadd.f32 0.0, %v1394
        %1396 = vdwg.mxu0
        %v1397 = vmul.f32 %v1367, 0.25
        %v1398 = vmul.f32 %v1395, 0.25
        %v1399 = vsel %vm926, %v1397, -1e+30
        %v1400 = vsel %vm926, %v1398, -1e+30
        %v1401 = vrot.slane %v888, 1
        %v1403 = vmul.f32 %v1337, %v888
        %v1404 = vmul.f32 %v1339, %v1401
        %v1405 = vsel %vm1021, %v1403, 0.0
        %1406 = vadd.xlane.f32.xlu0 %v1405
        %v1407 = vpop.xlane.xlu0 %1406
        %v1408 = vsel %vm1021, %v1404, 0.0
        %1409 = vadd.xlane.f32.xlu0 %v1408
        %v1410 = vpop.xlane.xlu0 %1409
        %v1411 = vmul.f32 %v1407, 0.25
        %v1412 = vmul.f32 %v1410, 0.25
        %v1413 = vsel %vm1021, %v1399, -inf
        %1414 = vmax.xlane.f32.xlu0 %v1413
        %v1415 = vpop.xlane.xlu0 %1414
        %v1416 = vsel %vm1021, %v1400, -inf
        %1417 = vmax.xlane.f32.xlu0 %v1416
        %v1418 = vpop.xlane.xlu0 %1417
        %v1419 = vmax.f32 %v1415, %v1411
        %v1420 = vmax.f32 %v1418, %v1412
        %v1421 = vsub.f32 %v1399, %v1419
        %v1422 = vsub.f32 %v1400, %v1420
        %v1423 = vmul.f32 %v1421, 1.442695
        %v1424 = vpow.pop %v1423
        %v1425 = vmul.f32 %v1422, 1.442695
        %v1426 = vpow.pop %v1425
        %v1427 = vsub.f32 %v1411, %v1419
        %v1428 = vsub.f32 %v1412, %v1420
        %v1429 = vmul.f32 %v1427, 1.442695
        %v1430 = vpow.pop %v1429
        %v1431 = vmul.f32 %v1428, 1.442695
        %v1432 = vpow.pop %v1431
        %v1433 = vsel %vm1021, %v1424, 0.0
        %1434 = vadd.xlane.f32.xlu0 %v1433
        %v1435 = vpop.xlane.xlu0 %1434
        %v1436 = vsel %vm1021, %v1426, 0.0
        %1437 = vadd.xlane.f32.xlu0 %v1436
        %v1438 = vpop.xlane.xlu0 %1437
        %v1439 = vadd.f32 %v1435, %v1430
        %v1440 = vadd.f32 %v1438, %v1432
        %v1441 = vrcp.pop %v1439
        %v1442 = vrcp.pop %v1440
        %v1444 = vsel %vm955, %v1424, 0
        %1446 = vmatpush.msra.mxu0 0.0
        %1447 = vmatpush.msra.mxu0 0.0
        %1448 = vmatpush.msra.mxu0 0.0
        %1449 = vmatpush.msra.mxu0 0.0
        %1450 = vmatpush.msra.mxu0 0.0
        %1451 = vmatpush.msra.mxu0 0.0
        %1452 = vmatpush.msra.mxu0 0.0
        %1453 = vmatpush.msra.mxu0 0.0
        %1454 = vmatpush.msra.mxu0 0.0
        %1455 = vmatpush.msra.mxu0 0.0
        %1456 = vmatpush.msra.mxu0 0.0
        %1457 = vmatpush.msra.mxu0 0.0
        %1458 = vmatpush.msra.mxu0 0.0
        %1459 = vmatpush.msra.mxu0 0.0
        %1460 = vmatpush.msra.mxu0 %v920
        %1461 = vmatpush.msra.mxu0 %v919
        %1462 = vmatmul.f32.gmra.mxu0 %v1444
        %v1463 = vpop.f32.mrf.mxu0
        %v1464 = vadd.f32 0.0, %v1463
        %1465 = vdwg.mxu0
        %v1467 = vsel %vm955, %v1426, 0
        %1469 = vmatpush.msra.mxu0 0.0
        %1470 = vmatpush.msra.mxu0 0.0
        %1471 = vmatpush.msra.mxu0 0.0
        %1472 = vmatpush.msra.mxu0 0.0
        %1473 = vmatpush.msra.mxu0 0.0
        %1474 = vmatpush.msra.mxu0 0.0
        %1475 = vmatpush.msra.mxu0 0.0
        %1476 = vmatpush.msra.mxu0 0.0
        %1477 = vmatpush.msra.mxu0 0.0
        %1478 = vmatpush.msra.mxu0 0.0
        %1479 = vmatpush.msra.mxu0 0.0
        %1480 = vmatpush.msra.mxu0 0.0
        %1481 = vmatpush.msra.mxu0 0.0
        %1482 = vmatpush.msra.mxu0 0.0
        %1483 = vmatpush.msra.mxu0 %v922
        %1484 = vmatpush.msra.mxu0 %v921
        %1485 = vmatmul.f32.gmra.mxu0 %v1467
        %v1486 = vpop.f32.mrf.mxu0
        %v1487 = vadd.f32 0.0, %v1486
        %1488 = vdwg.mxu0
        %v1489 = vmul.f32 %v1464, %v1441
        %v1490 = vmul.f32 %v1487, %v1442
        %v1491 = vmul.f32 %v1430, %v1441
        %v1492 = vmul.f32 %v1432, %v1442
        %1493 = vrot.lane.b32.xlu0 %v1111, 16
        %v1494 = vpop.permute.xlu0 %1493
        %1495 = vrot.lane.b32.xlu0 %v1112, 16
        %v1496 = vpop.permute.xlu0 %1495
        %v1499 = vmul.f32 %v1491, %v1494
        %v1500 = vmul.f32 %v1492, %v1496
        %v1501 = vadd.f32 %v1489, %v1499
        %v1502 = vadd.f32 %v1490, %v1500
        %1503 = vrot.lane.b32.xlu0 %v813, 48
        %v1504 = vpop.permute.xlu0 %1503
        %v1506 = vmul.f32 %v808, %v1504
        %1507 = vrot.lane.b32.xlu0 %v820, 56
        %v1508 = vpop.permute.xlu0 %1507
        %v1510 = vmul.f32 %v808, %v1508
        %1512 = vrot.lane.b32.xlu0 %v1510, 120
        %v1513 = vpop.permute.xlu0 %1512
        %v1515 = vsub.f32 %v1506, %v1513
        %1516 = vrot.lane.b32.xlu0 %v820, 48
        %v1517 = vpop.permute.xlu0 %1516
        %v1519 = vmul.f32 %v808, %v1517
        %1520 = vrot.lane.b32.xlu0 %v813, 56
        %v1521 = vpop.permute.xlu0 %1520
        %v1523 = vmul.f32 %v808, %v1521
        %1525 = vrot.lane.b32.xlu0 %v1523, 120
        %v1526 = vpop.permute.xlu0 %1525
        %v1528 = vadd.f32 %v1519, %v1526
        %1530 = vrot.lane.b32.xlu0 %v1515, 80
        %v1531 = vpop.permute.xlu0 %1530
        %1534 = vrot.lane.b32.xlu0 %v1528, 88
        %v1535 = vpop.permute.xlu0 %1534
        %v1537 = vsel %vm852, %v1531, %v1535
        %v1539 = vrot.slane %v1537, 1
        %v1541 = vsel %vm955, %v1537, 0
        %1543 = vmatpush.xpose.msra.mxu0 0.0
        %1544 = vmatpush.xpose.msra.mxu0 0.0
        %1545 = vmatpush.xpose.msra.mxu0 0.0
        %1546 = vmatpush.xpose.msra.mxu0 0.0
        %1547 = vmatpush.xpose.msra.mxu0 0.0
        %1548 = vmatpush.xpose.msra.mxu0 0.0
        %1549 = vmatpush.xpose.msra.mxu0 0.0
        %1550 = vmatpush.xpose.msra.mxu0 0.0
        %1551 = vmatpush.xpose.msra.mxu0 0.0
        %1552 = vmatpush.xpose.msra.mxu0 0.0
        %1553 = vmatpush.xpose.msra.mxu0 0.0
        %1554 = vmatpush.xpose.msra.mxu0 0.0
        %1555 = vmatpush.xpose.msra.mxu0 0.0
        %1556 = vmatpush.xpose.msra.mxu0 0.0
        %1557 = vmatpush.xpose.msra.mxu0 %v1347
        %1558 = vmatpush.xpose.msra.mxu0 %v1344
        %1559 = vmatmul.f32.gmra.mxu0 %v1541
        %v1560 = vpop.f32.mrf.mxu0
        %v1561 = vadd.f32 0.0, %v1560
        %1562 = vdwg.mxu0
        %v1563 = vsel %vm955, %v1539, 0
        %1565 = vmatpush.xpose.msra.mxu0 0.0
        %1566 = vmatpush.xpose.msra.mxu0 0.0
        %1567 = vmatpush.xpose.msra.mxu0 0.0
        %1568 = vmatpush.xpose.msra.mxu0 0.0
        %1569 = vmatpush.xpose.msra.mxu0 0.0
        %1570 = vmatpush.xpose.msra.mxu0 0.0
        %1571 = vmatpush.xpose.msra.mxu0 0.0
        %1572 = vmatpush.xpose.msra.mxu0 0.0
        %1573 = vmatpush.xpose.msra.mxu0 0.0
        %1574 = vmatpush.xpose.msra.mxu0 0.0
        %1575 = vmatpush.xpose.msra.mxu0 0.0
        %1576 = vmatpush.xpose.msra.mxu0 0.0
        %1577 = vmatpush.xpose.msra.mxu0 0.0
        %1578 = vmatpush.xpose.msra.mxu0 0.0
        %1579 = vmatpush.xpose.msra.mxu0 %v1375
        %1580 = vmatpush.xpose.msra.mxu0 %v1372
        %1581 = vmatmul.f32.gmra.mxu0 %v1563
        %v1582 = vpop.f32.mrf.mxu0
        %v1583 = vadd.f32 0.0, %v1582
        %1584 = vdwg.mxu0
        %v1585 = vmul.f32 %v1561, 0.25
        %v1586 = vmul.f32 %v1583, 0.25
        %v1587 = vsel %vm926, %v1585, -1e+30
        %v1588 = vsel %vm926, %v1586, -1e+30
        %v1589 = vmul.f32 %v1537, %v888
        %v1590 = vmul.f32 %v1539, %v1401
        %v1591 = vsel %vm1021, %v1589, 0.0
        %1592 = vadd.xlane.f32.xlu0 %v1591
        %v1593 = vpop.xlane.xlu0 %1592
        %v1594 = vsel %vm1021, %v1590, 0.0
        %1595 = vadd.xlane.f32.xlu0 %v1594
        %v1596 = vpop.xlane.xlu0 %1595
        %v1597 = vmul.f32 %v1593, 0.25
        %v1598 = vmul.f32 %v1596, 0.25
        %v1599 = vsel %vm1021, %v1587, -inf
        %1600 = vmax.xlane.f32.xlu0 %v1599
        %v1601 = vpop.xlane.xlu0 %1600
        %v1602 = vsel %vm1021, %v1588, -inf
        %1603 = vmax.xlane.f32.xlu0 %v1602
        %v1604 = vpop.xlane.xlu0 %1603
        %v1605 = vmax.f32 %v1601, %v1597
        %v1606 = vmax.f32 %v1604, %v1598
        %v1607 = vsub.f32 %v1587, %v1605
        %v1608 = vsub.f32 %v1588, %v1606
        %v1609 = vmul.f32 %v1607, 1.442695
        %v1610 = vpow.pop %v1609
        %v1611 = vmul.f32 %v1608, 1.442695
        %v1612 = vpow.pop %v1611
        %v1613 = vsub.f32 %v1597, %v1605
        %v1614 = vsub.f32 %v1598, %v1606
        %v1615 = vmul.f32 %v1613, 1.442695
        %v1616 = vpow.pop %v1615
        %v1617 = vmul.f32 %v1614, 1.442695
        %v1618 = vpow.pop %v1617
        %v1619 = vsel %vm1021, %v1610, 0.0
        %1620 = vadd.xlane.f32.xlu0 %v1619
        %v1621 = vpop.xlane.xlu0 %1620
        %v1622 = vsel %vm1021, %v1612, 0.0
        %1623 = vadd.xlane.f32.xlu0 %v1622
        %v1624 = vpop.xlane.xlu0 %1623
        %v1625 = vadd.f32 %v1621, %v1616
        %v1626 = vadd.f32 %v1624, %v1618
        %v1627 = vrcp.pop %v1625
        %v1628 = vrcp.pop %v1626
        %v1630 = vsel %vm955, %v1610, 0
        %1632 = vmatpush.msra.mxu0 0.0
        %1633 = vmatpush.msra.mxu0 0.0
        %1634 = vmatpush.msra.mxu0 0.0
        %1635 = vmatpush.msra.mxu0 0.0
        %1636 = vmatpush.msra.mxu0 0.0
        %1637 = vmatpush.msra.mxu0 0.0
        %1638 = vmatpush.msra.mxu0 0.0
        %1639 = vmatpush.msra.mxu0 0.0
        %1640 = vmatpush.msra.mxu0 0.0
        %1641 = vmatpush.msra.mxu0 0.0
        %1642 = vmatpush.msra.mxu0 0.0
        %1643 = vmatpush.msra.mxu0 0.0
        %1644 = vmatpush.msra.mxu0 0.0
        %1645 = vmatpush.msra.mxu0 0.0
        %1646 = vmatpush.msra.mxu0 %v920
        %1647 = vmatpush.msra.mxu0 %v919
        %1648 = vmatmul.f32.gmra.mxu0 %v1630
        %v1649 = vpop.f32.mrf.mxu0
        %v1650 = vadd.f32 0.0, %v1649
        %1651 = vdwg.mxu0
        %v1653 = vsel %vm955, %v1612, 0
        %1655 = vmatpush.msra.mxu0 0.0
        %1656 = vmatpush.msra.mxu0 0.0
        %1657 = vmatpush.msra.mxu0 0.0
        %1658 = vmatpush.msra.mxu0 0.0
        %1659 = vmatpush.msra.mxu0 0.0
        %1660 = vmatpush.msra.mxu0 0.0
        %1661 = vmatpush.msra.mxu0 0.0
        %1662 = vmatpush.msra.mxu0 0.0
        %1663 = vmatpush.msra.mxu0 0.0
        %1664 = vmatpush.msra.mxu0 0.0
        %1665 = vmatpush.msra.mxu0 0.0
        %1666 = vmatpush.msra.mxu0 0.0
        %1667 = vmatpush.msra.mxu0 0.0
        %1668 = vmatpush.msra.mxu0 0.0
        %1669 = vmatpush.msra.mxu0 %v922
        %1670 = vmatpush.msra.mxu0 %v921
        %1671 = vmatmul.f32.gmra.mxu0 %v1653
        %v1672 = vpop.f32.mrf.mxu0
        %v1673 = vadd.f32 0.0, %v1672
        %1674 = vdwg.mxu0
        %v1675 = vmul.f32 %v1650, %v1627
        %v1676 = vmul.f32 %v1673, %v1628
        %v1677 = vmul.f32 %v1616, %v1627
        %v1678 = vmul.f32 %v1618, %v1628
        %v1679 = vmul.f32 %v1677, %v1494
        %v1680 = vmul.f32 %v1678, %v1496
        %v1681 = vadd.f32 %v1675, %v1679
        %v1682 = vadd.f32 %v1676, %v1680
        %v1685 = vrot.slane %v1122, 7
        %vm1686 = vcmask 1041409
        %v1687 = vsel %vm1686, %v1685, %v1121
        %v1691 = vrot.slane %v1302, 7
        %v1692 = vsel %vm1686, %v1691, %v1301
        %1693 = vrot.lane.b32.xlu0 %v1692, 16
        %v1694 = vpop.permute.xlu0 %1693
        %v1698 = vrot.slane %v1502, 7
        %v1699 = vsel %vm1686, %v1698, %v1501
        %1700 = vrot.lane.b32.xlu0 %v1699, 32
        %v1701 = vpop.permute.xlu0 %1700
        %v1705 = vrot.slane %v1682, 7
        %v1706 = vsel %vm1686, %v1705, %v1681
        %1707 = vrot.lane.b32.xlu0 %v1706, 48
        %v1708 = vpop.permute.xlu0 %1707
        %v1710 = vsel %vm955, %v1687, %v1694
        %vm1711 = vcmask 261120
        %v1712 = vsel %vm1711, %v1710, %v1701
        %vm1713 = vcmask 392192
        %v1714 = vsel %vm1713, %v1712, %v1708
        %v1715 = vld [vmem:[%s606] sm:$0xff]
        %v1716 = vld [vmem:[%s606 + $0x8] sm:$0xff]
        %v1717 = vld [vmem:[%s606 + $0x10] sm:$0xff]
        %v1718 = vld [vmem:[%s606 + $0x18] sm:$0xff]
        %v1719 = vld [vmem:[%s606 + $0x20] sm:$0xff]
        %v1720 = vld [vmem:[%s606 + $0x28] sm:$0xff]
        %v1721 = vld [vmem:[%s606 + $0x30] sm:$0xff]
        %v1722 = vld [vmem:[%s606 + $0x38] sm:$0xff]
        %v1724 = vsel %vm786, %v1714, 0
        %1726 = vmatpush.msra.mxu0 0.0
        %1727 = vmatpush.msra.mxu0 0.0
        %1728 = vmatpush.msra.mxu0 0.0
        %1729 = vmatpush.msra.mxu0 0.0
        %1730 = vmatpush.msra.mxu0 0.0
        %1731 = vmatpush.msra.mxu0 0.0
        %1732 = vmatpush.msra.mxu0 0.0
        %1733 = vmatpush.msra.mxu0 0.0
        %1734 = vmatpush.msra.mxu0 %v1722
        %1735 = vmatpush.msra.mxu0 %v1721
        %1736 = vmatpush.msra.mxu0 %v1720
        %1737 = vmatpush.msra.mxu0 %v1719
        %1738 = vmatpush.msra.mxu0 %v1718
        %1739 = vmatpush.msra.mxu0 %v1717
        %1740 = vmatpush.msra.mxu0 %v1716
        %1741 = vmatpush.msra.mxu0 %v1715
        %1742 = vmatmul.f32.gmra.mxu0 %v1724
        %v1743 = vpop.f32.mrf.mxu0
        %v1744 = vadd.f32 0.0, %v1743
        %1745 = vdwg.mxu0
        %v1746 = vadd.f32 %v747, %v1744
        %v1747 = vmul.f32 %v1746, %v1746
        %v1748 = vsel %vm749, %v1747, 0.0
        %1749 = vadd.xlane.f32.xlu0 %v1748
        %v1750 = vpop.xlane.xlu0 %1749
        %v1751 = vmul.f32 %v1750, %v759
        %v1752 = vld [vmem:[%s715] sm:$0x1]
        %v1753 = vadd.f32 %v1751, 1e-05
        %v1754 = vrsqrt.pop %v1753
        %v1755 = vmul.f32 %v1754, %v1753
        %v1756 = vmul.f32 %v1755, %v1754
        %v1757 = vmul.f32 0.5, %v1756
        %v1758 = vsub.f32 1.5, %v1757
        %v1759 = vmul.f32 %v1754, %v1758
        %vm1760 = vweird.f32 %v1753
        %vm1761 = vweird.f32 %v1754
        %vm1762 = vmor %vm1760, %vm1761
        %v1763 = vsel %vm1762, %v1754, %v1759
        %v1764 = vmul.f32 %v1746, %v1763
        %v1766 = vperm.slane %v1752, 0
        %v1768 = vmul.f32 %v1766, %v1764
        %v1769 = vld [vmem:[%s720] sm:$0xff]
        %v1770 = vld [vmem:[%s720 + $0x8] sm:$0xff]
        %v1771 = vld [vmem:[%s720 + $0x10] sm:$0xff]
        %v1772 = vld [vmem:[%s720 + $0x18] sm:$0xff]
        %v1773 = vld [vmem:[%s720 + $0x20] sm:$0xff]
        %v1774 = vld [vmem:[%s720 + $0x28] sm:$0xff]
        %v1775 = vld [vmem:[%s720 + $0x30] sm:$0xff]
        %v1776 = vld [vmem:[%s720 + $0x38] sm:$0xff]
        %v1777 = vld [vmem:[%s720 + $0x40] sm:$0xff]
        %v1778 = vld [vmem:[%s720 + $0x48] sm:$0xff]
        %v1779 = vld [vmem:[%s720 + $0x50] sm:$0xff]
        %v1780 = vld [vmem:[%s720 + $0x58] sm:$0xff]
        %v1781 = vld [vmem:[%s720 + $0x60] sm:$0xff]
        %v1782 = vld [vmem:[%s720 + $0x68] sm:$0xff]
        %v1783 = vld [vmem:[%s720 + $0x70] sm:$0xff]
        %v1784 = vld [vmem:[%s720 + $0x78] sm:$0xff]
        %v1786 = vsel %vm786, %v1768, 0
        %1788 = vmatpush.msra.mxu0 0.0
        %1789 = vmatpush.msra.mxu0 0.0
        %1790 = vmatpush.msra.mxu0 0.0
        %1791 = vmatpush.msra.mxu0 0.0
        %1792 = vmatpush.msra.mxu0 0.0
        %1793 = vmatpush.msra.mxu0 0.0
        %1794 = vmatpush.msra.mxu0 0.0
        %1795 = vmatpush.msra.mxu0 0.0
        %1796 = vmatpush.msra.mxu0 %v1783
        %1797 = vmatpush.msra.mxu0 %v1781
        %1798 = vmatpush.msra.mxu0 %v1779
        %1799 = vmatpush.msra.mxu0 %v1777
        %1800 = vmatpush.msra.mxu0 %v1775
        %1801 = vmatpush.msra.mxu0 %v1773
        %1802 = vmatpush.msra.mxu0 %v1771
        %1803 = vmatpush.msra.mxu0 %v1769
        %1804 = vmatmul.f32.gmra.mxu0 %v1786
        %v1805 = vpop.f32.mrf.mxu0
        %v1806 = vadd.f32 0.0, %v1805
        %1807 = vdwg.mxu0
        %1808 = vmatpush.msra.mxu0 0.0
        %1809 = vmatpush.msra.mxu0 0.0
        %1810 = vmatpush.msra.mxu0 0.0
        %1811 = vmatpush.msra.mxu0 0.0
        %1812 = vmatpush.msra.mxu0 0.0
        %1813 = vmatpush.msra.mxu0 0.0
        %1814 = vmatpush.msra.mxu0 0.0
        %1815 = vmatpush.msra.mxu0 0.0
        %1816 = vmatpush.msra.mxu0 %v1784
        %1817 = vmatpush.msra.mxu0 %v1782
        %1818 = vmatpush.msra.mxu0 %v1780
        %1819 = vmatpush.msra.mxu0 %v1778
        %1820 = vmatpush.msra.mxu0 %v1776
        %1821 = vmatpush.msra.mxu0 %v1774
        %1822 = vmatpush.msra.mxu0 %v1772
        %1823 = vmatpush.msra.mxu0 %v1770
        %1824 = vmatmul.f32.gmra.mxu0 %v1786
        %v1825 = vpop.f32.mrf.mxu0
        %v1826 = vadd.f32 0.0, %v1825
        %1827 = vdwg.mxu0
        %v1828 = vld [vmem:[%s725] sm:$0xff]
        %v1829 = vld [vmem:[%s725 + $0x8] sm:$0xff]
        %v1830 = vld [vmem:[%s725 + $0x10] sm:$0xff]
        %v1831 = vld [vmem:[%s725 + $0x18] sm:$0xff]
        %v1832 = vld [vmem:[%s725 + $0x20] sm:$0xff]
        %v1833 = vld [vmem:[%s725 + $0x28] sm:$0xff]
        %v1834 = vld [vmem:[%s725 + $0x30] sm:$0xff]
        %v1835 = vld [vmem:[%s725 + $0x38] sm:$0xff]
        %v1836 = vld [vmem:[%s725 + $0x40] sm:$0xff]
        %v1837 = vld [vmem:[%s725 + $0x48] sm:$0xff]
        %v1838 = vld [vmem:[%s725 + $0x50] sm:$0xff]
        %v1839 = vld [vmem:[%s725 + $0x58] sm:$0xff]
        %v1840 = vld [vmem:[%s725 + $0x60] sm:$0xff]
        %v1841 = vld [vmem:[%s725 + $0x68] sm:$0xff]
        %v1842 = vld [vmem:[%s725 + $0x70] sm:$0xff]
        %v1843 = vld [vmem:[%s725 + $0x78] sm:$0xff]
        %1844 = vmatpush.msra.mxu0 0.0
        %1845 = vmatpush.msra.mxu0 0.0
        %1846 = vmatpush.msra.mxu0 0.0
        %1847 = vmatpush.msra.mxu0 0.0
        %1848 = vmatpush.msra.mxu0 0.0
        %1849 = vmatpush.msra.mxu0 0.0
        %1850 = vmatpush.msra.mxu0 0.0
        %1851 = vmatpush.msra.mxu0 0.0
        %1852 = vmatpush.msra.mxu0 %v1842
        %1853 = vmatpush.msra.mxu0 %v1840
        %1854 = vmatpush.msra.mxu0 %v1838
        %1855 = vmatpush.msra.mxu0 %v1836
        %1856 = vmatpush.msra.mxu0 %v1834
        %1857 = vmatpush.msra.mxu0 %v1832
        %1858 = vmatpush.msra.mxu0 %v1830
        %1859 = vmatpush.msra.mxu0 %v1828
        %1860 = vmatmul.f32.gmra.mxu0 %v1786
        %v1861 = vpop.f32.mrf.mxu0
        %v1862 = vadd.f32 0.0, %v1861
        %1863 = vdwg.mxu0
        %1864 = vmatpush.msra.mxu0 0.0
        %1865 = vmatpush.msra.mxu0 0.0
        %1866 = vmatpush.msra.mxu0 0.0
        %1867 = vmatpush.msra.mxu0 0.0
        %1868 = vmatpush.msra.mxu0 0.0
        %1869 = vmatpush.msra.mxu0 0.0
        %1870 = vmatpush.msra.mxu0 0.0
        %1871 = vmatpush.msra.mxu0 0.0
        %1872 = vmatpush.msra.mxu0 %v1843
        %1873 = vmatpush.msra.mxu0 %v1841
        %1874 = vmatpush.msra.mxu0 %v1839
        %1875 = vmatpush.msra.mxu0 %v1837
        %1876 = vmatpush.msra.mxu0 %v1835
        %1877 = vmatpush.msra.mxu0 %v1833
        %1878 = vmatpush.msra.mxu0 %v1831
        %1879 = vmatpush.msra.mxu0 %v1829
        %1880 = vmatmul.f32.gmra.mxu0 %v1786
        %v1881 = vpop.f32.mrf.mxu0
        %v1882 = vadd.f32 0.0, %v1881
        %1883 = vdwg.mxu0
        %v1884 = vxor.u32 %v1806, 2147483648
        %v1885 = vxor.u32 %v1826, 2147483648
        %v1886 = vmul.f32 %v1884, 1.442695
        %v1887 = vpow.pop %v1886
        %v1888 = vmul.f32 %v1885, 1.442695
        %v1889 = vpow.pop %v1888
        %v1890 = vadd.f32 %v1887, 1.0
        %v1891 = vadd.f32 %v1889, 1.0
        %v1892 = vrcp.pop %v1890
        %v1893 = vmul.f32 %v1890, %v1892
        %v1894 = vsub.f32 1.0, %v1893
        %v1895 = vmul.f32 %v1892, %v1894
        %v1896 = vadd.f32 %v1892, %v1895
        %vm1897 = vweird.f32 %v1890
        %vm1898 = vweird.f32 %v1892
        %vm1899 = vmor %vm1897, %vm1898
        %v1900 = vsel %vm1899, %v1892, %v1896
        %v1901 = vand.u32 2147483647, %v1890
        %vm1902 = vcmp.eq.f32.partialorder %v1901, 8.507059e+37
        %v1903 = vand.u32 %v1890, 2147483648
        %v1904 = vor.u32 1.1754944e-38, %v1903
        %v1905 = vsel %vm1902, %v1904, %v1900
        %v1906 = vmul.f32 1.0, %v1905
        %v1907 = vrcp.pop %v1891
        %v1908 = vmul.f32 %v1891, %v1907
        %v1909 = vsub.f32 1.0, %v1908
        %v1910 = vmul.f32 %v1907, %v1909
        %v1911 = vadd.f32 %v1907, %v1910
        %vm1912 = vweird.f32 %v1891
        %vm1913 = vweird.f32 %v1907
        %vm1914 = vmor %vm1912, %vm1913
        %v1915 = vsel %vm1914, %v1907, %v1911
        %v1916 = vand.u32 2147483647, %v1891
        %vm1917 = vcmp.eq.f32.partialorder %v1916, 8.507059e+37
        %v1918 = vand.u32 %v1891, 2147483648
        %v1919 = vor.u32 1.1754944e-38, %v1918
        %v1920 = vsel %vm1917, %v1919, %v1915
        %v1921 = vmul.f32 1.0, %v1920
        %v1922 = vmul.f32 %v1806, %v1906
        %v1923 = vmul.f32 %v1826, %v1921
        %v1924 = vmul.f32 %v1922, %v1862
        %v1925 = vmul.f32 %v1923, %v1882
        %v1926 = vld [vmem:[%s730] sm:$0xff]
        %v1927 = vld [vmem:[%s730 + $0x8] sm:$0xff]
        %v1928 = vld [vmem:[%s730 + $0x10] sm:$0xff]
        %v1929 = vld [vmem:[%s730 + $0x18] sm:$0xff]
        %v1930 = vld [vmem:[%s730 + $0x20] sm:$0xff]
        %v1931 = vld [vmem:[%s730 + $0x28] sm:$0xff]
        %v1932 = vld [vmem:[%s730 + $0x30] sm:$0xff]
        %v1933 = vld [vmem:[%s730 + $0x38] sm:$0xff]
        %v1934 = vld [vmem:[%s730 + $0x40] sm:$0xff]
        %v1935 = vld [vmem:[%s730 + $0x48] sm:$0xff]
        %v1936 = vld [vmem:[%s730 + $0x50] sm:$0xff]
        %v1937 = vld [vmem:[%s730 + $0x58] sm:$0xff]
        %v1938 = vld [vmem:[%s730 + $0x60] sm:$0xff]
        %v1939 = vld [vmem:[%s730 + $0x68] sm:$0xff]
        %v1940 = vld [vmem:[%s730 + $0x70] sm:$0xff]
        %v1941 = vld [vmem:[%s730 + $0x78] sm:$0xff]
        %v1942 = vld [vmem:[%s730 + $0x80] sm:$0xff]
        %v1943 = vld [vmem:[%s730 + $0x88] sm:$0xff]
        %v1944 = vld [vmem:[%s730 + $0x90] sm:$0xff]
        %v1945 = vld [vmem:[%s730 + $0x98] sm:$0xff]
        %v1946 = vld [vmem:[%s730 + $0xa0] sm:$0xff]
        %v1947 = vld [vmem:[%s730 + $0xa8] sm:$0xff]
        %v1948 = vld [vmem:[%s730 + $0xb0] sm:$0xff]
        %v1949 = vld [vmem:[%s730 + $0xb8] sm:$0xff]
        %v1950 = vld [vmem:[%s730 + $0xc0] sm:$0xff]
        %v1951 = vld [vmem:[%s730 + $0xc8] sm:$0xff]
        %v1952 = vld [vmem:[%s730 + $0xd0] sm:$0xff]
        %v1953 = vld [vmem:[%s730 + $0xd8] sm:$0xff]
        %v1954 = vld [vmem:[%s730 + $0xe0] sm:$0xff]
        %v1955 = vld [vmem:[%s730 + $0xe8] sm:$0xff]
        %v1956 = vld [vmem:[%s730 + $0xf0] sm:$0xff]
        %v1957 = vld [vmem:[%s730 + $0xf8] sm:$0xff]
        %1958 = vmatpush.msra.mxu0 %v1941
        %1959 = vmatpush.msra.mxu0 %v1940
        %1960 = vmatpush.msra.mxu0 %v1939
        %1961 = vmatpush.msra.mxu0 %v1938
        %1962 = vmatpush.msra.mxu0 %v1937
        %1963 = vmatpush.msra.mxu0 %v1936
        %1964 = vmatpush.msra.mxu0 %v1935
        %1965 = vmatpush.msra.mxu0 %v1934
        %1966 = vmatpush.msra.mxu0 %v1933
        %1967 = vmatpush.msra.mxu0 %v1932
        %1968 = vmatpush.msra.mxu0 %v1931
        %1969 = vmatpush.msra.mxu0 %v1930
        %1970 = vmatpush.msra.mxu0 %v1929
        %1971 = vmatpush.msra.mxu0 %v1928
        %1972 = vmatpush.msra.mxu0 %v1927
        %1973 = vmatpush.msra.mxu0 %v1926
        %1974 = vmatmul.f32.gmra.mxu0 %v1924
        %v1975 = vpop.f32.mrf.mxu0
        %v1976 = vadd.f32 0.0, %v1975
        %1977 = vdwg.mxu0
        %1978 = vmatpush.msra.mxu0 %v1957
        %1979 = vmatpush.msra.mxu0 %v1956
        %1980 = vmatpush.msra.mxu0 %v1955
        %1981 = vmatpush.msra.mxu0 %v1954
        %1982 = vmatpush.msra.mxu0 %v1953
        %1983 = vmatpush.msra.mxu0 %v1952
        %1984 = vmatpush.msra.mxu0 %v1951
        %1985 = vmatpush.msra.mxu0 %v1950
        %1986 = vmatpush.msra.mxu0 %v1949
        %1987 = vmatpush.msra.mxu0 %v1948
        %1988 = vmatpush.msra.mxu0 %v1947
        %1989 = vmatpush.msra.mxu0 %v1946
        %1990 = vmatpush.msra.mxu0 %v1945
        %1991 = vmatpush.msra.mxu0 %v1944
        %1992 = vmatpush.msra.mxu0 %v1943
        %1993 = vmatpush.msra.mxu0 %v1942
        %1994 = vmatmul.f32.gmra.mxu0 %v1925
        %v1995 = vpop.f32.mrf.mxu0
        %v1996 = vadd.f32 %v1976, %v1995
        %1997 = vdwg.mxu0
        %v1998 = vadd.f32 %v1746, %v1996
        %1999 = vst.msk [vmem:[#allocation2] sm:$0x3] %vm749, %v1998
        %p2000 = scmp.eq.s32.totalorder %s37, 1
        // Predicated region
        $region93: #{transformer_forward.1} parent=75 // pred_check
          %p2001 = pneg %p2000
        $region94: #{transformer_forward.1} parent=75 // pred_check_branch
          %2003 = sbr.rel (%p2001) target = $region96
        $region95: #{transformer_forward.1} parent=75 // pred_region
          %v2004 = vmul.f32 %v1998, %v1998
          %v2005 = vsel %vm749, %v2004, 0.0
          %2006 = vadd.xlane.f32.xlu0 %v2005
          %v2007 = vpop.xlane.xlu0 %2006
          %v2008 = vmul.f32 %v2007, %v759
          %v2009 = vld [vmem:[%s13] sm:$0x1]
          %v2010 = vadd.f32 %v2008, 1e-05
          %v2011 = vrsqrt.pop %v2010
          %v2012 = vmul.f32 %v2011, %v2010
          %v2013 = vmul.f32 %v2012, %v2011
          %v2014 = vmul.f32 0.5, %v2013
          %v2015 = vsub.f32 1.5, %v2014
          %v2016 = vmul.f32 %v2011, %v2015
          %vm2017 = vweird.f32 %v2010
          %vm2018 = vweird.f32 %v2011
          %vm2019 = vmor %vm2017, %vm2018
          %v2020 = vsel %vm2019, %v2011, %v2016
          %v2021 = vmul.f32 %v1998, %v2020
          %v2023 = vperm.slane %v2009, 0
          %v2025 = vmul.f32 %v2023, %v2021
          %v2026 = vld [vmem:[#allocation10] sm:$0xff]
          %v2027 = vld [vmem:[#allocation10 + $0x8] sm:$0xff]
          %v2028 = vld [vmem:[#allocation10 + $0x10] sm:$0xff]
          %v2029 = vld [vmem:[#allocation10 + $0x18] sm:$0xff]
          %v2030 = vld [vmem:[#allocation10 + $0x20] sm:$0xff]
          %v2031 = vld [vmem:[#allocation10 + $0x28] sm:$0xff]
          %v2032 = vld [vmem:[#allocation10 + $0x30] sm:$0xff]
          %v2033 = vld [vmem:[#allocation10 + $0x38] sm:$0xff]
          %v2035 = vsel %vm786, %v2025, 0
          %2037 = vmatpush.msra.mxu0 0.0
          %2038 = vmatpush.msra.mxu0 0.0
          %2039 = vmatpush.msra.mxu0 0.0
          %2040 = vmatpush.msra.mxu0 0.0
          %2041 = vmatpush.msra.mxu0 0.0
          %2042 = vmatpush.msra.mxu0 0.0
          %2043 = vmatpush.msra.mxu0 0.0
          %2044 = vmatpush.msra.mxu0 0.0
          %2045 = vmatpush.msra.mxu0 %v2033
          %2046 = vmatpush.msra.mxu0 %v2032
          %2047 = vmatpush.msra.mxu0 %v2031
          %2048 = vmatpush.msra.mxu0 %v2030
          %2049 = vmatpush.msra.mxu0 %v2029
          %2050 = vmatpush.msra.mxu0 %v2028
          %2051 = vmatpush.msra.mxu0 %v2027
          %2052 = vmatpush.msra.mxu0 %v2026
          %2053 = vmatmul.f32.gmra.mxu0 %v2035
          %v2054 = vpop.f32.mrf.mxu0
          %v2055 = vadd.f32 0.0, %v2054
          %2056 = vdwg.mxu0
          %2057 = vst [vmem:[#allocation11] sm:$0x3] %v2055
        $region96: #{transformer_forward.1} parent=75 // pred_fallthru
          _
        %p2058 = scmp.lt.s32.totalorder %s37, 1
        %s2059 = scalar_select %p2058, %s37, 1
        %s2060 = smul.addr %s2059, 4
        %s2061 = scalar_lea.vmem %s16, %s2060
        %p2062 = scmp.lt.s32.totalorder %s37, 1
        %s2063 = scalar_select %p2062, %s37, 1
        %s2064 = smul.addr %s2063, 4
        %s2065 = scalar_lea.vmem %s17, %s2064
        // Predicated region
        $region97: #{transformer_forward.1} parent=75 // pred_check
          %p2066 = pneg %p389
        $region98: #{transformer_forward.1} parent=75 // pred_check_branch
          %2068 = sbr.rel (%p2066) target = $region100
        $region99: #{transformer_forward.1} parent=75 // pred_region
          %2070 = vsyncadd [#allocation7], 0
          %s2072 = sshll.u32 [#allocation11], 4
          %s2073 = int_to_ptr.vmem [resolvable:$true] %s2072
          %s2074 = sshll.u32 %s15, 4
          %s2075 = int_to_ptr.hbm [resolvable:$true] %s2074
          %2077 = dma.vmem_to_hbm [thread:$0]  %s2073, 32, %s2075, [#allocation7]
        $region100: #{transformer_forward.1} parent=75 // pred_fallthru
          _
        // Predicated region
        $region101: #{transformer_forward.1} parent=75 // pred_check
          %p2078 = pneg %p415
        $region102: #{transformer_forward.1} parent=75 // pred_check_branch
          %2080 = sbr.rel (%p2078) target = $region104
        $region103: #{transformer_forward.1} parent=75 // pred_region
          _
        $region104: #{transformer_forward.1} parent=75 // pred_fallthru
          _
        // Predicated region
        $region105: #{transformer_forward.1} parent=75 // pred_check
          %p2081 = pneg %p441
        $region106: #{transformer_forward.1} parent=75 // pred_check_branch
          %2083 = sbr.rel (%p2081) target = $region108
        $region107: #{transformer_forward.1} parent=75 // pred_region
          _
        $region108: #{transformer_forward.1} parent=75 // pred_fallthru
          _
        // Predicated region
        $region109: #{transformer_forward.1} parent=75 // pred_check
          %p2084 = pneg %p389
        $region110: #{transformer_forward.1} parent=75 // pred_check_branch
          %2086 = sbr.rel (%p2084) target = $region112
        $region111: #{transformer_forward.1} parent=75 // pred_region
          %2088 = dma.done [#allocation7], 32
        $region112: #{transformer_forward.1} parent=75 // pred_fallthru
          _
      $region76: #{transformer_forward.1} parent=5 // pred_fallthru
        _
      %p2089 = scmp.le.s32.totalorder 2, %s32
      // Predicated region
      $region113: #{transformer_forward.1} parent=5 // pred_check
        %p2090 = pneg %p2089
      $region114: #{transformer_forward.1} parent=5 // pred_check_branch
        %2092 = sbr.rel (%p2090) target = $region116
      $region115: #{transformer_forward.1} parent=5 // pred_region
        %s2093 = ssub.s32 %s32, 2
        // Predicated region
        $region117: #{transformer_forward.1} parent=115 // pred_check
          %p2094 = pneg %p421
        $region118: #{transformer_forward.1} parent=115 // pred_check_branch
          %2096 = sbr.rel (%p2094) target = $region120
        $region119: #{transformer_forward.1} parent=115 // pred_region
          %p2097 = scmp.lt.s32.totalorder %s38, 1
          %s2098 = scalar_select %p2097, %s38, 1
          %s2099 = smul.addr %s2098, 4
          %s2100 = scalar_lea.vmem %s16, %s2099
        $region120: #{transformer_forward.1} parent=115 // pred_fallthru
          _
        // Predicated region
        $region121: #{transformer_forward.1} parent=115 // pred_check
          %p2101 = pneg %p447
        $region122: #{transformer_forward.1} parent=115 // pred_check_branch
          %2103 = sbr.rel (%p2101) target = $region124
        $region123: #{transformer_forward.1} parent=115 // pred_region
          %p2104 = scmp.lt.s32.totalorder %s38, 1
          %s2105 = scalar_select %p2104, %s38, 1
          %s2106 = smul.addr %s2105, 4
          %s2107 = scalar_lea.vmem %s17, %s2106
        $region124: #{transformer_forward.1} parent=115 // pred_fallthru
          _
      $region116: #{transformer_forward.1} parent=5 // pred_fallthru
        _
    $region6: #{transformer_forward.1} parent=1 // loop_footer
      %s36 = sadd.s32 1, %s32
    $region7: #{transformer_forward.1} parent=1 // loop_footer_branch
      %31 = sbr.rel target = $region3
    $region8: #{transformer_forward.1} parent=1 // loop_exit
      _
    %2108 = vsyncpa [#allocation6], 1
    %s2109 = scalar_lea.sflag [#allocation6], 1
    %2110 = vsyncpa %s2109, 1
    %2111 = vsyncpa [#allocation9], 1
    %s2112 = scalar_lea.sflag [#allocation9], 1
    %2113 = vsyncpa %s2112, 1
    %2114 = vsyncpa [#allocation7], 1
    %s2115 = scalar_lea.sflag [#allocation7], 1
    %2116 = vsyncpa %s2115, 1

</llo_original>
